<compile_context>
chip_gen: v7x
topology: tpu7x:2x2x1
jax: 0.10.0
libtpu: 0.0.40
codegen_flags: <defaults>
</compile_context>

<pallas_src>
import jax
import jax.numpy as jnp
from jax import lax
from jax.experimental import pallas as pl
from jax.experimental.pallas import tpu as pltpu

EMBEDDING_DIM = 3
N_HIDDEN = 5
NUM_CLASSES = 2
VOCAB_SIZE = 16


# ----------------------------- fused kernel ---------------------------------
def _bilstm_attention_kernel(ids_f_ref,    # (T*B, 1) int32  token id feeding fwd dir at step s
                             ids_b_ref,    # (T*B, 1) int32  token id feeding bwd dir at step s
                             xtab_f_ref,   # (V, 8H) f32     emb @ Wx_fwd in fwd gate cols
                             xtab_b_ref,   # (V, 8H) f32     emb @ Wx_bwd in bwd gate cols
                             bias_ref,     # (1, 8H) f32
                             wh_ref,       # (2H, 8H) f32    block-diagonal recurrent W
                             pe_ref,       # (B, 2B) f32     even-row selector (torch view quirk)
                             po_ref,       # (B, 2B) f32     odd-row selector
                             tile_ref,     # (2H, T*2H) f32  hid -> tiled hid
                             ssel_ref,     # (T*2H, T) f32   slab-column -> time selector
                             sselT_ref,    # (T, T*2H) f32   its transpose
                             wout_slab_ref,  # (T*2H, C) f32 W_out pre-permuted onto slab cols
                             bout_ref,     # (1, C) f32
                             logits_ref,   # (B, C) f32
                             attn_ref):    # (B, T) f32
    f32 = jnp.float32
    B, T = attn_ref.shape
    V = xtab_f_ref.shape[0]
    H2, G8 = wh_ref.shape                 # 2H, 8H
    H = H2 // 2
    TB = ids_f_ref.shape[0]               # T*B

    # ---- (1) embedding gather + x-projection as one-hot matmuls (2 MXU pushes) ----
    v_iota = lax.broadcasted_iota(jnp.int32, (TB, V), 1)
    oh_f = (ids_f_ref[...] == v_iota).astype(f32)            # (T*B, V)
    oh_b = (ids_b_ref[...] == v_iota).astype(f32)            # (T*B, V), time-reversed ids
    xcomb = (jnp.dot(oh_f, xtab_f_ref[...], preferred_element_type=f32)
             + jnp.dot(oh_b, xtab_b_ref[...], preferred_element_type=f32)
             + bias_ref[...])                                 # (T*B, 8H), t-major rows

    wh = wh_ref[...]

    # ---- (2) fused bidirectional recurrence, fully unrolled; 1 MXU + 3 EUP per step ----
    h2 = jnp.zeros((B, H2), f32)          # [h_fwd | h_bwd]
    c2 = jnp.zeros((B, H2), f32)
    steps = []
    for s in range(T):
        gates = xcomb[s * B:(s + 1) * B, :] + jnp.dot(h2, wh, preferred_element_type=f32)
        sg = jax.nn.sigmoid(gates)        # whole-vreg: i/f/o of both directions, 1 EUP push
        th = jnp.tanh(gates)              # whole-vreg: g of both directions,      1 EUP push
        c2 = sg[:, H2:2 * H2] * c2 + sg[:, 0:H2] * th[:, 2 * H2:3 * H2]
        h2 = sg[:, 3 * H2:4 * H2] * jnp.tanh(c2)              # 3rd EUP push
        steps.append(h2)
    # TODO(synk): on v5e/v6e benchmark replacing jnp.dot(h2, wh) with a VPU broadcast-MAC
    #             over the 2H contraction (MRF drain vs ~20 VALU ops); MXU kept for v7x.

    # ---- (3) attention epilogue: lane-dense slab + pack-time-constant matmuls ----
    slab = jnp.concatenate(steps, axis=1)                     # (B, T*2H); col s*2H+j =
    #   j <  H : out[:, t=s,     j]   (forward hidden of step s)
    #   j >= H : out[:, t=T-1-s, j]   (backward hidden written at step s)

    # torch quirk: hidden = stack([h_fwd_final, h_bwd_final], 0).view(B, 2H)
    stacked = jnp.concatenate([h2[:, :H], h2[:, H:]], axis=0)  # (2B, H) direction-major
    hid = jnp.concatenate(
        [jnp.dot(pe_ref[...], stacked, preferred_element_type=f32),
         jnp.dot(po_ref[...], stacked, preferred_element_type=f32)], axis=1)   # (B, 2H)
    hid_tile = jnp.dot(hid, tile_ref[...], preferred_element_type=f32)         # (B, T*2H)

    # all T attention scores with ONE multiply + ONE MXU push
    scores = jnp.dot(slab * hid_tile, ssel_ref[...], preferred_element_type=f32)  # (B, T)

    m = jnp.max(scores, axis=1, keepdims=True)
    e = jnp.exp(scores - m)
    denom = jnp.sum(e, axis=1, keepdims=True)
    r = pl.reciprocal(denom, approx=True)                     # EUP slot (otherwise idle)
    r = r * (2.0 - denom * r)                                 # one Newton step -> ~1e-7 rel err
    soft = e * r                                              # (B, T), lane-dense
    attn_ref[...] = soft

    # context + output Linear fused: logits = (slab * soft_expanded) @ (P_d @ W_out^T) + b
    soft_exp = jnp.dot(soft, sselT_ref[...], preferred_element_type=f32)        # (B, T*2H)
    logits_ref[...] = (jnp.dot(slab * soft_exp, wout_slab_ref[...],
                               preferred_element_type=f32) + bout_ref[...])


# --------------------- one-time parameter packing (glue) ---------------------
def pack_params(params, B, T):
    """Parameter/shape-only packing (done once; not on the per-example path)."""
    H = N_HIDDEN
    H2 = 2 * H
    f32 = jnp.float32

    def widen(m4, off):
        # m4: (R, 4H) with column blocks [i|f|g|o]; gate g goes to columns
        # [2*g*H + off : 2*g*H + off + H] of an (R, 8H) matrix (off=0 fwd, off=H bwd).
        R = m4.shape[0]
        z = jnp.zeros((R, H), f32)
        blocks = []
        for g in range(4):
            blk = m4[:, g * H:(g + 1) * H]
            blocks.extend([blk, z] if off == 0 else [z, blk])
        return jnp.concatenate(blocks, axis=1)                 # (R, 8H)

    def direction(w_ih, w_hh, b_ih, b_hh, off):
        wx = widen(w_ih.T.astype(f32), off)                    # (E, 8H)
        wh = widen(w_hh.T.astype(f32), off)                    # (H, 8H)
        b = widen((b_ih + b_hh)[None, :].astype(f32), off)     # (1, 8H)
        return wx, wh, b

    wx_f, wh_f, b_f = direction(params["w_ih_f"], params["w_hh_f"],
                                params["b_ih_f"], params["b_hh_f"], 0)
    wx_b, wh_b, b_b = direction(params["w_ih_b"], params["w_hh_b"],
                                params["b_ih_b"], params["b_hh_b"], H)

    emb = params["embedding"].astype(f32)                      # (V, E)
    xtab_f = emb @ wx_f                                        # (V, 8H) embedding folded into
    xtab_b = emb @ wx_b                                        #          the x-projection
    bias_c = b_f + b_b                                         # (1, 8H)
    wh_block = jnp.concatenate([wh_f, wh_b], axis=0)           # (2H, 8H) block-diagonal

    # ---- epilogue constants: fold time/feature permutations + W_out into matmuls ----
    c_idx = jnp.arange(T * H2)
    s_c = c_idx // H2                                          # combined-loop step of column c
    j_c = c_idx % H2                                           # position inside [h_fwd | h_bwd]
    t_c = jnp.where(j_c < H, s_c, T - 1 - s_c)                 # original time of column c
    s_sel = (t_c[:, None] == jnp.arange(T)[None, :]).astype(f32)        # (T*2H, T)
    s_selT = s_sel.T                                                     # (T, T*2H)
    tile_mat = (jnp.arange(H2)[:, None] == j_c[None, :]).astype(f32)     # (2H, T*2H)
    wout_t = params["w_out"].T.astype(f32)                               # (2H, C)
    wout_slab = wout_t[j_c, :]                                           # (T*2H, C)
    bout = params["b_out"][None, :].astype(f32)                          # (1, C)

    # torch `stack((2,B,H)).view(B,2H)` quirk as even/odd row selectors of the
    # direction-major (2B, H) stack of final states.
    pe = (jnp.arange(2 * B)[None, :] == (2 * jnp.arange(B))[:, None]).astype(f32)      # (B, 2B)
    po = (jnp.arange(2 * B)[None, :] == (2 * jnp.arange(B) + 1)[:, None]).astype(f32)  # (B, 2B)

    return (xtab_f, xtab_b, bias_c, wh_block, pe, po, tile_mat,
            s_sel, s_selT, wout_slab, bout)


# --------------------------------- wrapper -----------------------------------
def forward_from_packed(X, packed):
    (xtab_f, xtab_b, bias_c, wh_block, pe, po, tile_mat,
     s_sel, s_selT, wout_slab, bout) = packed
    B, T = X.shape
    C = wout_slab.shape[1]

    # Token-id bookkeeping only (B*T int32 = a few dozen bytes): t-major forward ids and
    # t-major time-reversed ids, shaped (T*B, 1) so the kernel's one-hot is a single
    # iota-compare with no in-kernel integer relayout.
    Xi = X.astype(jnp.int32)
    ids_f = Xi.T.reshape(T * B, 1)                # row t*B+b = X[b, t]
    ids_b = Xi[:, ::-1].T.reshape(T * B, 1)       # row t*B+b = X[b, T-1-t]

    operands = (ids_f, ids_b, xtab_f, xtab_b, bias_c, wh_block, pe, po,
                tile_mat, s_sel, s_selT, wout_slab, bout)

    logits, attn = pl.pallas_call(
        _bilstm_attention_kernel,
        out_shape=(jax.ShapeDtypeStruct((B, C), jnp.float32),
                   jax.ShapeDtypeStruct((B, T), jnp.float32)),
        in_specs=[pl.BlockSpec(memory_space=pltpu.MemorySpace.VMEM)] * len(operands),
        out_specs=(pl.BlockSpec(memory_space=pltpu.MemorySpace.VMEM),
                   pl.BlockSpec(memory_space=pltpu.MemorySpace.VMEM)),
    )(*operands)
    return logits, attn


def bilstm_attention_forward(X, params):
    B, T = X.shape
    return forward_from_packed(X, pack_params(params, B, T))


# ------------------------- pure-JAX reference (check) ------------------------
def reference_forward(X, params):
    H = N_HIDDEN
    B, T = X.shape
    emb = jnp.take(params["embedding"], X, axis=0)
    x_tbe = jnp.transpose(emb, (1, 0, 2)).astype(jnp.float32)

    def run(w_ih, w_hh, b_ih, b_hh, xs):
        b = b_ih + b_hh

        def step(carry, x):
            h, c = carry
            gates = x @ w_ih.T + h @ w_hh.T + b
            i, f, g, o = jnp.split(gates, 4, axis=-1)
            i, f, o = jax.nn.sigmoid(i), jax.nn.sigmoid(f), jax.nn.sigmoid(o)
            g = jnp.tanh(g)
            c = f * c + i * g
            h = o * jnp.tanh(c)
            return (h, c), h

        init = (jnp.zeros((B, H), jnp.float32), jnp.zeros((B, H), jnp.float32))
        (hT, _), hs = lax.scan(step, init, xs)
        return hs, hT

    hs_f, hT_f = run(params["w_ih_f"], params["w_hh_f"], params["b_ih_f"], params["b_hh_f"], x_tbe)
    hs_b_rev, hT_b = run(params["w_ih_b"], params["w_hh_b"], params["b_ih_b"], params["b_hh_b"],
                         x_tbe[::-1])
    hs_b = hs_b_rev[::-1]
    output = jnp.transpose(jnp.concatenate([hs_f, hs_b], axis=-1), (1, 0, 2))   # (B,T,2H)
    hidden = jnp.stack([hT_f, hT_b], axis=0).reshape(B, 2 * H, 1)
    attn = jnp.squeeze(jnp.matmul(output, hidden), -1)
    soft = jax.nn.softmax(attn, axis=1)
    ctx = jnp.squeeze(jnp.matmul(jnp.transpose(output, (0, 2, 1)), soft[..., None]), -1)
    logits = ctx @ params["w_out"].T + params["b_out"]
    return logits, soft


def init_params(key):
    H, E, C, V = N_HIDDEN, EMBEDDING_DIM, NUM_CLASSES, VOCAB_SIZE
    keys = jax.random.split(key, 11)
    u = lambda k, s: jax.random.uniform(k, s, jnp.float32, -0.5, 0.5)
    return {
        "embedding": u(keys[0], (V, E)),
        "w_ih_f": u(keys[1], (4 * H, E)), "w_hh_f": u(keys[2], (4 * H, H)),
        "b_ih_f": u(keys[3], (4 * H,)),   "b_hh_f": u(keys[4], (4 * H,)),
        "w_ih_b": u(keys[5], (4 * H, E)), "w_hh_b": u(keys[6], (4 * H, H)),
        "b_ih_b": u(keys[7], (4 * H,)),   "b_hh_b": u(keys[8], (4 * H,)),
        "w_out": u(keys[9], (C, 2 * H)),  "b_out": u(keys[10], (C,)),
    }


if __name__ == "__main__":
    key = jax.random.PRNGKey(0)
    pkey, xkey = jax.random.split(key)
    params = init_params(pkey)

    T = 8
    # B=2 matches the module spec; B=8 exercises the batching lever (fills vreg sublanes)
    # with the identical single-MXU-push-per-step recurrence.
    for B in (2, 8):
        X = jax.random.randint(jax.random.fold_in(xkey, B), (B, T), 0, VOCAB_SIZE,
                               dtype=jnp.int32)
        packed = pack_params(params, B, T)       # one-time, parameter/shape-only packing
        logits, attention = forward_from_packed(X, packed)
        logits = jax.block_until_ready(logits)
        attention = jax.block_until_ready(attention)

        ref_logits, ref_attn = reference_forward(X, params)
        assert logits.shape == (B, NUM_CLASSES) and attention.shape == (B, T)
        assert jnp.allclose(logits, ref_logits, atol=1e-4, rtol=1e-4)
        assert jnp.allclose(attention, ref_attn, atol=1e-4, rtol=1e-4)

    print("KERNEL_OK")
</pallas_src>

<mosaic_0001>
module attributes {stable_mosaic.version = 11 : i64} {
  func.func @_bilstm_attention_kernel(%arg0: memref<16x1xi32, #tpu.memory_space<vmem>>, %arg1: memref<16x1xi32, #tpu.memory_space<vmem>>, %arg2: memref<16x40xf32, #tpu.memory_space<vmem>>, %arg3: memref<16x40xf32, #tpu.memory_space<vmem>>, %arg4: memref<1x40xf32, #tpu.memory_space<vmem>>, %arg5: memref<10x40xf32, #tpu.memory_space<vmem>>, %arg6: memref<2x4xf32, #tpu.memory_space<vmem>>, %arg7: memref<2x4xf32, #tpu.memory_space<vmem>>, %arg8: memref<10x80xf32, #tpu.memory_space<vmem>>, %arg9: memref<80x8xf32, #tpu.memory_space<vmem>>, %arg10: memref<8x80xf32, #tpu.memory_space<vmem>>, %arg11: memref<80x2xf32, #tpu.memory_space<vmem>>, %arg12: memref<1x2xf32, #tpu.memory_space<vmem>>, %arg13: memref<2x2xf32, #tpu.memory_space<vmem>>, %arg14: memref<2x8xf32, #tpu.memory_space<vmem>>) attributes {dimension_semantics = [], scalar_prefetch = 0 : i64, scratch_operands = 0 : i64, tpu.core_type = #tpu.core_type<tc>} {
    %0 = tpu.iota {dimensions = array<i32: 1>} : vector<16x16xi32>
    %c0 = arith.constant 0 : index
    %c0_0 = arith.constant 0 : index
    %1 = vector.load %arg0[%c0, %c0_0] : memref<16x1xi32, #tpu.memory_space<vmem>>, vector<16x1xi32>
    %2 = vector.broadcast %1 : vector<16x1xi32> to vector<16x16xi32>
    %3 = arith.cmpi eq, %2, %0 : vector<16x16xi32>
    %4 = arith.extui %3 : vector<16x16xi1> to vector<16x16xi32>
    %5 = arith.sitofp %4 : vector<16x16xi32> to vector<16x16xf32>
    %c0_1 = arith.constant 0 : index
    %c0_2 = arith.constant 0 : index
    %6 = vector.load %arg1[%c0_1, %c0_2] : memref<16x1xi32, #tpu.memory_space<vmem>>, vector<16x1xi32>
    %7 = vector.broadcast %6 : vector<16x1xi32> to vector<16x16xi32>
    %8 = arith.cmpi eq, %7, %0 : vector<16x16xi32>
    %9 = arith.extui %8 : vector<16x16xi1> to vector<16x16xi32>
    %10 = arith.sitofp %9 : vector<16x16xi32> to vector<16x16xf32>
    %c0_3 = arith.constant 0 : index
    %c0_4 = arith.constant 0 : index
    %11 = vector.load %arg2[%c0_3, %c0_4] : memref<16x40xf32, #tpu.memory_space<vmem>>, vector<16x40xf32>
    %cst = arith.constant dense<0.000000e+00> : vector<16x40xf32>
    %12 = tpu.matmul %5, %11, %cst {dimension_numbers = #tpu.dot_dimension_numbers<[1], [0], [0], [1], [0, 0, 1, 1], [], []>} : vector<16x16xf32>, vector<16x40xf32>, vector<16x40xf32> -> vector<16x40xf32>
    %c0_5 = arith.constant 0 : index
    %c0_6 = arith.constant 0 : index
    %13 = vector.load %arg3[%c0_5, %c0_6] : memref<16x40xf32, #tpu.memory_space<vmem>>, vector<16x40xf32>
    %cst_7 = arith.constant dense<0.000000e+00> : vector<16x40xf32>
    %14 = tpu.matmul %10, %13, %cst_7 {dimension_numbers = #tpu.dot_dimension_numbers<[1], [0], [0], [1], [0, 0, 1, 1], [], []>} : vector<16x16xf32>, vector<16x40xf32>, vector<16x40xf32> -> vector<16x40xf32>
    %15 = arith.addf %12, %14 : vector<16x40xf32>
    %c0_8 = arith.constant 0 : index
    %c0_9 = arith.constant 0 : index
    %16 = vector.load %arg4[%c0_8, %c0_9] : memref<1x40xf32, #tpu.memory_space<vmem>>, vector<1x40xf32>
    %17 = vector.broadcast %16 : vector<1x40xf32> to vector<16x40xf32>
    %18 = arith.addf %15, %17 : vector<16x40xf32>
    %c0_10 = arith.constant 0 : index
    %c0_11 = arith.constant 0 : index
    %19 = vector.load %arg5[%c0_10, %c0_11] : memref<10x40xf32, #tpu.memory_space<vmem>>, vector<10x40xf32>
    %cst_12 = arith.constant 0.000000e+00 : f32
    %20 = vector.broadcast %cst_12 : f32 to vector<2x10xf32>
    %cst_13 = arith.constant 0.000000e+00 : f32
    %21 = vector.broadcast %cst_13 : f32 to vector<2x10xf32>
    %22 = vector.extract_strided_slice %18 {offsets = [0, 0], sizes = [2, 40], strides = [1, 1]} : vector<16x40xf32> to vector<2x40xf32>
    %cst_14 = arith.constant dense<0.000000e+00> : vector<2x40xf32>
    %23 = tpu.matmul %20, %19, %cst_14 {dimension_numbers = #tpu.dot_dimension_numbers<[1], [0], [0], [1], [0, 0, 1, 1], [], []>} : vector<2x10xf32>, vector<10x40xf32>, vector<2x40xf32> -> vector<2x40xf32>
    %24 = arith.addf %22, %23 : vector<2x40xf32>
    %25 = arith.negf %24 : vector<2x40xf32>
    %26 = math.exp %25 : vector<2x40xf32>
    %cst_15 = arith.constant 1.000000e+00 : f32
    %27 = vector.broadcast %cst_15 : f32 to vector<2x40xf32>
    %28 = arith.addf %27, %26 : vector<2x40xf32>
    %29 = arith.divf %27, %28 : vector<2x40xf32>
    %30 = math.tanh %24 : vector<2x40xf32>
    %31 = vector.extract_strided_slice %29 {offsets = [0, 10], sizes = [2, 10], strides = [1, 1]} : vector<2x40xf32> to vector<2x10xf32>
    %32 = arith.mulf %31, %21 : vector<2x10xf32>
    %33 = vector.extract_strided_slice %29 {offsets = [0, 0], sizes = [2, 10], strides = [1, 1]} : vector<2x40xf32> to vector<2x10xf32>
    %34 = vector.extract_strided_slice %30 {offsets = [0, 20], sizes = [2, 10], strides = [1, 1]} : vector<2x40xf32> to vector<2x10xf32>
    %35 = arith.mulf %33, %34 : vector<2x10xf32>
    %36 = arith.addf %32, %35 : vector<2x10xf32>
    %37 = vector.extract_strided_slice %29 {offsets = [0, 30], sizes = [2, 10], strides = [1, 1]} : vector<2x40xf32> to vector<2x10xf32>
    %38 = math.tanh %36 : vector<2x10xf32>
    %39 = arith.mulf %37, %38 : vector<2x10xf32>
    %40 = vector.extract_strided_slice %18 {offsets = [2, 0], sizes = [2, 40], strides = [1, 1]} : vector<16x40xf32> to vector<2x40xf32>
    %cst_16 = arith.constant dense<0.000000e+00> : vector<2x40xf32>
    %41 = tpu.matmul %39, %19, %cst_16 {dimension_numbers = #tpu.dot_dimension_numbers<[1], [0], [0], [1], [0, 0, 1, 1], [], []>} : vector<2x10xf32>, vector<10x40xf32>, vector<2x40xf32> -> vector<2x40xf32>
    %42 = arith.addf %40, %41 : vector<2x40xf32>
    %43 = arith.negf %42 : vector<2x40xf32>
    %44 = math.exp %43 : vector<2x40xf32>
    %cst_17 = arith.constant 1.000000e+00 : f32
    %45 = vector.broadcast %cst_17 : f32 to vector<2x40xf32>
    %46 = arith.addf %45, %44 : vector<2x40xf32>
    %47 = arith.divf %45, %46 : vector<2x40xf32>
    %48 = math.tanh %42 : vector<2x40xf32>
    %49 = vector.extract_strided_slice %47 {offsets = [0, 10], sizes = [2, 10], strides = [1, 1]} : vector<2x40xf32> to vector<2x10xf32>
    %50 = arith.mulf %49, %36 : vector<2x10xf32>
    %51 = vector.extract_strided_slice %47 {offsets = [0, 0], sizes = [2, 10], strides = [1, 1]} : vector<2x40xf32> to vector<2x10xf32>
    %52 = vector.extract_strided_slice %48 {offsets = [0, 20], sizes = [2, 10], strides = [1, 1]} : vector<2x40xf32> to vector<2x10xf32>
    %53 = arith.mulf %51, %52 : vector<2x10xf32>
    %54 = arith.addf %50, %53 : vector<2x10xf32>
    %55 = vector.extract_strided_slice %47 {offsets = [0, 30], sizes = [2, 10], strides = [1, 1]} : vector<2x40xf32> to vector<2x10xf32>
    %56 = math.tanh %54 : vector<2x10xf32>
    %57 = arith.mulf %55, %56 : vector<2x10xf32>
    %58 = vector.extract_strided_slice %18 {offsets = [4, 0], sizes = [2, 40], strides = [1, 1]} : vector<16x40xf32> to vector<2x40xf32>
    %cst_18 = arith.constant dense<0.000000e+00> : vector<2x40xf32>
    %59 = tpu.matmul %57, %19, %cst_18 {dimension_numbers = #tpu.dot_dimension_numbers<[1], [0], [0], [1], [0, 0, 1, 1], [], []>} : vector<2x10xf32>, vector<10x40xf32>, vector<2x40xf32> -> vector<2x40xf32>
    %60 = arith.addf %58, %59 : vector<2x40xf32>
    %61 = arith.negf %60 : vector<2x40xf32>
    %62 = math.exp %61 : vector<2x40xf32>
    %cst_19 = arith.constant 1.000000e+00 : f32
    %63 = vector.broadcast %cst_19 : f32 to vector<2x40xf32>
    %64 = arith.addf %63, %62 : vector<2x40xf32>
    %65 = arith.divf %63, %64 : vector<2x40xf32>
    %66 = math.tanh %60 : vector<2x40xf32>
    %67 = vector.extract_strided_slice %65 {offsets = [0, 10], sizes = [2, 10], strides = [1, 1]} : vector<2x40xf32> to vector<2x10xf32>
    %68 = arith.mulf %67, %54 : vector<2x10xf32>
    %69 = vector.extract_strided_slice %65 {offsets = [0, 0], sizes = [2, 10], strides = [1, 1]} : vector<2x40xf32> to vector<2x10xf32>
    %70 = vector.extract_strided_slice %66 {offsets = [0, 20], sizes = [2, 10], strides = [1, 1]} : vector<2x40xf32> to vector<2x10xf32>
    %71 = arith.mulf %69, %70 : vector<2x10xf32>
    %72 = arith.addf %68, %71 : vector<2x10xf32>
    %73 = vector.extract_strided_slice %65 {offsets = [0, 30], sizes = [2, 10], strides = [1, 1]} : vector<2x40xf32> to vector<2x10xf32>
    %74 = math.tanh %72 : vector<2x10xf32>
    %75 = arith.mulf %73, %74 : vector<2x10xf32>
    %76 = vector.extract_strided_slice %18 {offsets = [6, 0], sizes = [2, 40], strides = [1, 1]} : vector<16x40xf32> to vector<2x40xf32>
    %cst_20 = arith.constant dense<0.000000e+00> : vector<2x40xf32>
    %77 = tpu.matmul %75, %19, %cst_20 {dimension_numbers = #tpu.dot_dimension_numbers<[1], [0], [0], [1], [0, 0, 1, 1], [], []>} : vector<2x10xf32>, vector<10x40xf32>, vector<2x40xf32> -> vector<2x40xf32>
    %78 = arith.addf %76, %77 : vector<2x40xf32>
    %79 = arith.negf %78 : vector<2x40xf32>
    %80 = math.exp %79 : vector<2x40xf32>
    %cst_21 = arith.constant 1.000000e+00 : f32
    %81 = vector.broadcast %cst_21 : f32 to vector<2x40xf32>
    %82 = arith.addf %81, %80 : vector<2x40xf32>
    %83 = arith.divf %81, %82 : vector<2x40xf32>
    %84 = math.tanh %78 : vector<2x40xf32>
    %85 = vector.extract_strided_slice %83 {offsets = [0, 10], sizes = [2, 10], strides = [1, 1]} : vector<2x40xf32> to vector<2x10xf32>
    %86 = arith.mulf %85, %72 : vector<2x10xf32>
    %87 = vector.extract_strided_slice %83 {offsets = [0, 0], sizes = [2, 10], strides = [1, 1]} : vector<2x40xf32> to vector<2x10xf32>
    %88 = vector.extract_strided_slice %84 {offsets = [0, 20], sizes = [2, 10], strides = [1, 1]} : vector<2x40xf32> to vector<2x10xf32>
    %89 = arith.mulf %87, %88 : vector<2x10xf32>
    %90 = arith.addf %86, %89 : vector<2x10xf32>
    %91 = vector.extract_strided_slice %83 {offsets = [0, 30], sizes = [2, 10], strides = [1, 1]} : vector<2x40xf32> to vector<2x10xf32>
    %92 = math.tanh %90 : vector<2x10xf32>
    %93 = arith.mulf %91, %92 : vector<2x10xf32>
    %94 = vector.extract_strided_slice %18 {offsets = [8, 0], sizes = [2, 40], strides = [1, 1]} : vector<16x40xf32> to vector<2x40xf32>
    %cst_22 = arith.constant dense<0.000000e+00> : vector<2x40xf32>
    %95 = tpu.matmul %93, %19, %cst_22 {dimension_numbers = #tpu.dot_dimension_numbers<[1], [0], [0], [1], [0, 0, 1, 1], [], []>} : vector<2x10xf32>, vector<10x40xf32>, vector<2x40xf32> -> vector<2x40xf32>
    %96 = arith.addf %94, %95 : vector<2x40xf32>
    %97 = arith.negf %96 : vector<2x40xf32>
    %98 = math.exp %97 : vector<2x40xf32>
    %cst_23 = arith.constant 1.000000e+00 : f32
    %99 = vector.broadcast %cst_23 : f32 to vector<2x40xf32>
    %100 = arith.addf %99, %98 : vector<2x40xf32>
    %101 = arith.divf %99, %100 : vector<2x40xf32>
    %102 = math.tanh %96 : vector<2x40xf32>
    %103 = vector.extract_strided_slice %101 {offsets = [0, 10], sizes = [2, 10], strides = [1, 1]} : vector<2x40xf32> to vector<2x10xf32>
    %104 = arith.mulf %103, %90 : vector<2x10xf32>
    %105 = vector.extract_strided_slice %101 {offsets = [0, 0], sizes = [2, 10], strides = [1, 1]} : vector<2x40xf32> to vector<2x10xf32>
    %106 = vector.extract_strided_slice %102 {offsets = [0, 20], sizes = [2, 10], strides = [1, 1]} : vector<2x40xf32> to vector<2x10xf32>
    %107 = arith.mulf %105, %106 : vector<2x10xf32>
    %108 = arith.addf %104, %107 : vector<2x10xf32>
    %109 = vector.extract_strided_slice %101 {offsets = [0, 30], sizes = [2, 10], strides = [1, 1]} : vector<2x40xf32> to vector<2x10xf32>
    %110 = math.tanh %108 : vector<2x10xf32>
    %111 = arith.mulf %109, %110 : vector<2x10xf32>
    %112 = vector.extract_strided_slice %18 {offsets = [10, 0], sizes = [2, 40], strides = [1, 1]} : vector<16x40xf32> to vector<2x40xf32>
    %cst_24 = arith.constant dense<0.000000e+00> : vector<2x40xf32>
    %113 = tpu.matmul %111, %19, %cst_24 {dimension_numbers = #tpu.dot_dimension_numbers<[1], [0], [0], [1], [0, 0, 1, 1], [], []>} : vector<2x10xf32>, vector<10x40xf32>, vector<2x40xf32> -> vector<2x40xf32>
    %114 = arith.addf %112, %113 : vector<2x40xf32>
    %115 = arith.negf %114 : vector<2x40xf32>
    %116 = math.exp %115 : vector<2x40xf32>
    %cst_25 = arith.constant 1.000000e+00 : f32
    %117 = vector.broadcast %cst_25 : f32 to vector<2x40xf32>
    %118 = arith.addf %117, %116 : vector<2x40xf32>
    %119 = arith.divf %117, %118 : vector<2x40xf32>
    %120 = math.tanh %114 : vector<2x40xf32>
    %121 = vector.extract_strided_slice %119 {offsets = [0, 10], sizes = [2, 10], strides = [1, 1]} : vector<2x40xf32> to vector<2x10xf32>
    %122 = arith.mulf %121, %108 : vector<2x10xf32>
    %123 = vector.extract_strided_slice %119 {offsets = [0, 0], sizes = [2, 10], strides = [1, 1]} : vector<2x40xf32> to vector<2x10xf32>
    %124 = vector.extract_strided_slice %120 {offsets = [0, 20], sizes = [2, 10], strides = [1, 1]} : vector<2x40xf32> to vector<2x10xf32>
    %125 = arith.mulf %123, %124 : vector<2x10xf32>
    %126 = arith.addf %122, %125 : vector<2x10xf32>
    %127 = vector.extract_strided_slice %119 {offsets = [0, 30], sizes = [2, 10], strides = [1, 1]} : vector<2x40xf32> to vector<2x10xf32>
    %128 = math.tanh %126 : vector<2x10xf32>
    %129 = arith.mulf %127, %128 : vector<2x10xf32>
    %130 = vector.extract_strided_slice %18 {offsets = [12, 0], sizes = [2, 40], strides = [1, 1]} : vector<16x40xf32> to vector<2x40xf32>
    %cst_26 = arith.constant dense<0.000000e+00> : vector<2x40xf32>
    %131 = tpu.matmul %129, %19, %cst_26 {dimension_numbers = #tpu.dot_dimension_numbers<[1], [0], [0], [1], [0, 0, 1, 1], [], []>} : vector<2x10xf32>, vector<10x40xf32>, vector<2x40xf32> -> vector<2x40xf32>
    %132 = arith.addf %130, %131 : vector<2x40xf32>
    %133 = arith.negf %132 : vector<2x40xf32>
    %134 = math.exp %133 : vector<2x40xf32>
    %cst_27 = arith.constant 1.000000e+00 : f32
    %135 = vector.broadcast %cst_27 : f32 to vector<2x40xf32>
    %136 = arith.addf %135, %134 : vector<2x40xf32>
    %137 = arith.divf %135, %136 : vector<2x40xf32>
    %138 = math.tanh %132 : vector<2x40xf32>
    %139 = vector.extract_strided_slice %137 {offsets = [0, 10], sizes = [2, 10], strides = [1, 1]} : vector<2x40xf32> to vector<2x10xf32>
    %140 = arith.mulf %139, %126 : vector<2x10xf32>
    %141 = vector.extract_strided_slice %137 {offsets = [0, 0], sizes = [2, 10], strides = [1, 1]} : vector<2x40xf32> to vector<2x10xf32>
    %142 = vector.extract_strided_slice %138 {offsets = [0, 20], sizes = [2, 10], strides = [1, 1]} : vector<2x40xf32> to vector<2x10xf32>
    %143 = arith.mulf %141, %142 : vector<2x10xf32>
    %144 = arith.addf %140, %143 : vector<2x10xf32>
    %145 = vector.extract_strided_slice %137 {offsets = [0, 30], sizes = [2, 10], strides = [1, 1]} : vector<2x40xf32> to vector<2x10xf32>
    %146 = math.tanh %144 : vector<2x10xf32>
    %147 = arith.mulf %145, %146 : vector<2x10xf32>
    %148 = vector.extract_strided_slice %18 {offsets = [14, 0], sizes = [2, 40], strides = [1, 1]} : vector<16x40xf32> to vector<2x40xf32>
    %cst_28 = arith.constant dense<0.000000e+00> : vector<2x40xf32>
    %149 = tpu.matmul %147, %19, %cst_28 {dimension_numbers = #tpu.dot_dimension_numbers<[1], [0], [0], [1], [0, 0, 1, 1], [], []>} : vector<2x10xf32>, vector<10x40xf32>, vector<2x40xf32> -> vector<2x40xf32>
    %150 = arith.addf %148, %149 : vector<2x40xf32>
    %151 = arith.negf %150 : vector<2x40xf32>
    %152 = math.exp %151 : vector<2x40xf32>
    %cst_29 = arith.constant 1.000000e+00 : f32
    %153 = vector.broadcast %cst_29 : f32 to vector<2x40xf32>
    %154 = arith.addf %153, %152 : vector<2x40xf32>
    %155 = arith.divf %153, %154 : vector<2x40xf32>
    %156 = math.tanh %150 : vector<2x40xf32>
    %157 = vector.extract_strided_slice %155 {offsets = [0, 10], sizes = [2, 10], strides = [1, 1]} : vector<2x40xf32> to vector<2x10xf32>
    %158 = arith.mulf %157, %144 : vector<2x10xf32>
    %159 = vector.extract_strided_slice %155 {offsets = [0, 0], sizes = [2, 10], strides = [1, 1]} : vector<2x40xf32> to vector<2x10xf32>
    %160 = vector.extract_strided_slice %156 {offsets = [0, 20], sizes = [2, 10], strides = [1, 1]} : vector<2x40xf32> to vector<2x10xf32>
    %161 = arith.mulf %159, %160 : vector<2x10xf32>
    %162 = arith.addf %158, %161 : vector<2x10xf32>
    %163 = vector.extract_strided_slice %155 {offsets = [0, 30], sizes = [2, 10], strides = [1, 1]} : vector<2x40xf32> to vector<2x10xf32>
    %164 = math.tanh %162 : vector<2x10xf32>
    %165 = arith.mulf %163, %164 : vector<2x10xf32>
    %166 = tpu.concatenate %39, %57, %75, %93, %111, %129, %147, %165 in 1 : vector<2x10xf32>, vector<2x10xf32>, vector<2x10xf32>, vector<2x10xf32>, vector<2x10xf32>, vector<2x10xf32>, vector<2x10xf32>, vector<2x10xf32> -> vector<2x80xf32>
    %167 = vector.extract_strided_slice %165 {offsets = [0, 0], sizes = [2, 5], strides = [1, 1]} : vector<2x10xf32> to vector<2x5xf32>
    %168 = vector.extract_strided_slice %165 {offsets = [0, 5], sizes = [2, 5], strides = [1, 1]} : vector<2x10xf32> to vector<2x5xf32>
    %169 = tpu.concatenate %167, %168 in 0 : vector<2x5xf32>, vector<2x5xf32> -> vector<4x5xf32>
    %c0_30 = arith.constant 0 : index
    %c0_31 = arith.constant 0 : index
    %170 = vector.load %arg6[%c0_30, %c0_31] : memref<2x4xf32, #tpu.memory_space<vmem>>, vector<2x4xf32>
    %cst_32 = arith.constant dense<0.000000e+00> : vector<2x5xf32>
    %171 = tpu.matmul %170, %169, %cst_32 {dimension_numbers = #tpu.dot_dimension_numbers<[1], [0], [0], [1], [0, 0, 1, 1], [], []>} : vector<2x4xf32>, vector<4x5xf32>, vector<2x5xf32> -> vector<2x5xf32>
    %c0_33 = arith.constant 0 : index
    %c0_34 = arith.constant 0 : index
    %172 = vector.load %arg7[%c0_33, %c0_34] : memref<2x4xf32, #tpu.memory_space<vmem>>, vector<2x4xf32>
    %cst_35 = arith.constant dense<0.000000e+00> : vector<2x5xf32>
    %173 = tpu.matmul %172, %169, %cst_35 {dimension_numbers = #tpu.dot_dimension_numbers<[1], [0], [0], [1], [0, 0, 1, 1], [], []>} : vector<2x4xf32>, vector<4x5xf32>, vector<2x5xf32> -> vector<2x5xf32>
    %174 = tpu.concatenate %171, %173 in 1 : vector<2x5xf32>, vector<2x5xf32> -> vector<2x10xf32>
    %c0_36 = arith.constant 0 : index
    %c0_37 = arith.constant 0 : index
    %175 = vector.load %arg8[%c0_36, %c0_37] : memref<10x80xf32, #tpu.memory_space<vmem>>, vector<10x80xf32>
    %cst_38 = arith.constant dense<0.000000e+00> : vector<2x80xf32>
    %176 = tpu.matmul %174, %175, %cst_38 {dimension_numbers = #tpu.dot_dimension_numbers<[1], [0], [0], [1], [0, 0, 1, 1], [], []>} : vector<2x10xf32>, vector<10x80xf32>, vector<2x80xf32> -> vector<2x80xf32>
    %177 = arith.mulf %166, %176 : vector<2x80xf32>
    %c0_39 = arith.constant 0 : index
    %c0_40 = arith.constant 0 : index
    %178 = vector.load %arg9[%c0_39, %c0_40] : memref<80x8xf32, #tpu.memory_space<vmem>>, vector<80x8xf32>
    %cst_41 = arith.constant dense<0.000000e+00> : vector<2x8xf32>
    %179 = tpu.matmul %177, %178, %cst_41 {dimension_numbers = #tpu.dot_dimension_numbers<[1], [0], [0], [1], [0, 0, 1, 1], [], []>} : vector<2x80xf32>, vector<80x8xf32>, vector<2x8xf32> -> vector<2x8xf32>
    %cst_42 = arith.constant dense<0xFF800000> : vector<2xf32>
    %180 = vector.multi_reduction <maximumf>, %179, %cst_42 [1] : vector<2x8xf32> to vector<2xf32>
    %181 = vector.shape_cast %180 : vector<2xf32> to vector<2x1xf32>
    %182 = vector.broadcast %181 : vector<2x1xf32> to vector<2x8xf32>
    %183 = arith.subf %179, %182 : vector<2x8xf32>
    %184 = math.exp %183 : vector<2x8xf32>
    %cst_43 = arith.constant dense<0.000000e+00> : vector<2xf32>
    %185 = vector.multi_reduction <add>, %184, %cst_43 [1] : vector<2x8xf32> to vector<2xf32>
    %186 = vector.shape_cast %185 : vector<2xf32> to vector<2x1xf32>
    %187 = tpu.reciprocal %186 {approx = true} : vector<2x1xf32> -> vector<2x1xf32>
    %188 = arith.mulf %186, %187 : vector<2x1xf32>
    %cst_44 = arith.constant 2.000000e+00 : f32
    %189 = vector.broadcast %cst_44 : f32 to vector<2x1xf32>
    %190 = arith.subf %189, %188 : vector<2x1xf32>
    %191 = arith.mulf %187, %190 : vector<2x1xf32>
    %192 = vector.broadcast %191 : vector<2x1xf32> to vector<2x8xf32>
    %193 = arith.mulf %184, %192 : vector<2x8xf32>
    %c0_45 = arith.constant 0 : index
    %c0_46 = arith.constant 0 : index
    %194 = vector.load %arg14[%c0_45, %c0_46] : memref<2x8xf32, #tpu.memory_space<vmem>>, vector<2x8xf32>
    tpu.vector_store %arg14[%c0_45, %c0_46], %193 {strides = array<i32>} : memref<2x8xf32, #tpu.memory_space<vmem>>, vector<2x8xf32>,
    %c0_47 = arith.constant 0 : index
    %c0_48 = arith.constant 0 : index
    %195 = vector.load %arg10[%c0_47, %c0_48] : memref<8x80xf32, #tpu.memory_space<vmem>>, vector<8x80xf32>
    %cst_49 = arith.constant dense<0.000000e+00> : vector<2x80xf32>
    %196 = tpu.matmul %193, %195, %cst_49 {dimension_numbers = #tpu.dot_dimension_numbers<[1], [0], [0], [1], [0, 0, 1, 1], [], []>} : vector<2x8xf32>, vector<8x80xf32>, vector<2x80xf32> -> vector<2x80xf32>
    %197 = arith.mulf %166, %196 : vector<2x80xf32>
    %c0_50 = arith.constant 0 : index
    %c0_51 = arith.constant 0 : index
    %198 = vector.load %arg11[%c0_50, %c0_51] : memref<80x2xf32, #tpu.memory_space<vmem>>, vector<80x2xf32>
    %cst_52 = arith.constant dense<0.000000e+00> : vector<2x2xf32>
    %199 = tpu.matmul %197, %198, %cst_52 {dimension_numbers = #tpu.dot_dimension_numbers<[1], [0], [0], [1], [0, 0, 1, 1], [], []>} : vector<2x80xf32>, vector<80x2xf32>, vector<2x2xf32> -> vector<2x2xf32>
    %c0_53 = arith.constant 0 : index
    %c0_54 = arith.constant 0 : index
    %200 = vector.load %arg12[%c0_53, %c0_54] : memref<1x2xf32, #tpu.memory_space<vmem>>, vector<1x2xf32>
    %201 = vector.broadcast %200 : vector<1x2xf32> to vector<2x2xf32>
    %202 = arith.addf %199, %201 : vector<2x2xf32>
    %c0_55 = arith.constant 0 : index
    %c0_56 = arith.constant 0 : index
    %203 = vector.load %arg13[%c0_55, %c0_56] : memref<2x2xf32, #tpu.memory_space<vmem>>, vector<2x2xf32>
    tpu.vector_store %arg13[%c0_55, %c0_56], %202 {strides = array<i32>} : memref<2x2xf32, #tpu.memory_space<vmem>>, vector<2x2xf32>,
    return
  }
}

</mosaic_0001>

<llo_original>
// kernel: tpu_custom_call.1
$region0: #{tpu_custom_call.1}
  #allocation0 [shape = 'u32[]', space=smem, size = 0x4, offset = 0x4, fixed_abs, tag = 'smem constant byte address 0x4 - core index']
  #allocation1 [shape = 'u32[144,128]{1,0:T(1,128)}', space=vmem, size = 0x12000, scoped, tag = 'internal scratch']
  %s0 = inlined_call_operand.vmem [shape: s32[16,1], index: 0, kind: input, shape index: {}]
  %s1 = inlined_call_operand.vmem [shape: s32[16,1], index: 1, kind: input, shape index: {}]
  %s2 = inlined_call_operand.vmem [shape: f32[16,40], index: 2, kind: input, shape index: {}]
  %s3 = inlined_call_operand.vmem [shape: f32[16,40], index: 3, kind: input, shape index: {}]
  %s4 = inlined_call_operand.vmem [shape: f32[1,40], index: 4, kind: input, shape index: {}]
  %s5 = inlined_call_operand.vmem [shape: f32[10,40], index: 5, kind: input, shape index: {}]
  %s6 = inlined_call_operand.vmem [shape: f32[2,4], index: 6, kind: input, shape index: {}]
  %s7 = inlined_call_operand.vmem [shape: f32[2,4], index: 7, kind: input, shape index: {}]
  %s8 = inlined_call_operand.vmem [shape: f32[10,80], index: 8, kind: input, shape index: {}]
  %s9 = inlined_call_operand.vmem [shape: f32[80,8], index: 9, kind: input, shape index: {}]
  %s10 = inlined_call_operand.vmem [shape: f32[8,80], index: 10, kind: input, shape index: {}]
  %s11 = inlined_call_operand.vmem [shape: f32[80,2], index: 11, kind: input, shape index: {}]
  %s12 = inlined_call_operand.vmem [shape: f32[1,2], index: 12, kind: input, shape index: {}]
  %s13 = inlined_call_operand.hbm [shape: f32[2,2], index: 13, kind: output, shape index: {0}]
  %s14 = inlined_call_operand.hbm [shape: f32[2,8], index: 14, kind: output, shape index: {1}]
  %15 = xla_tuple %s13, %s14
  %s16 = sld [smem:[#allocation0]]
  $region70: #{tpu_custom_call.1} parent=0
    _
  %s18 = ssub.s32 1, %s16
  %s19 = scalar_select 0, %s18, %s16
  $region1: #{tpu_custom_call.1} parent=0
    #allocation2 [shape = 'u8[1024]{0}', space=vmem, size = 0x400, scoped, tag = 'output window, operand 0, single buffered']
    #allocation3 [shape = 's32[1]{0}', space=sflag, size = 0x4, scoped, tag = 'scoped memory for tpu_custom_call.1']
    #allocation4 [shape = 'u8[1024]{0}', space=vmem, size = 0x400, scoped, tag = 'output window, operand 1, single buffered']
    #allocation5 [shape = 's32[1]{0}', space=sflag, size = 0x4, scoped, tag = 'scoped memory for tpu_custom_call.1']
    %20 = vsyncpa [#allocation3], 0
    %21 = vsyncpa [#allocation5], 0
    // Predicated region
    $region2: #{tpu_custom_call.1} parent=1 // pred_check
      _
    $region3: #{tpu_custom_call.1} parent=1 // pred_check_branch
      %23 = sbr.rel (0) target = $region5
    $region4: #{tpu_custom_call.1} parent=1 // pred_region
      _
    $region5: #{tpu_custom_call.1} parent=1 // pred_fallthru
      _
    // Predicated region
    $region6: #{tpu_custom_call.1} parent=1 // pred_check
      _
    $region7: #{tpu_custom_call.1} parent=1 // pred_check_branch
      %25 = sbr.rel (0) target = $region9
    $region8: #{tpu_custom_call.1} parent=1 // pred_region
      _
    $region9: #{tpu_custom_call.1} parent=1 // pred_fallthru
      _
    // Predicated region
    $region10: #{tpu_custom_call.1} parent=1 // pred_check
      _
    $region11: #{tpu_custom_call.1} parent=1 // pred_check_branch
      %27 = sbr.rel (0) target = $region13
    $region12: #{tpu_custom_call.1} parent=1 // pred_region
      _
    $region13: #{tpu_custom_call.1} parent=1 // pred_fallthru
      _
    // Predicated region
    $region14: #{tpu_custom_call.1} parent=1 // pred_check
      _
    $region15: #{tpu_custom_call.1} parent=1 // pred_check_branch
      %29 = sbr.rel (0) target = $region17
    $region16: #{tpu_custom_call.1} parent=1 // pred_region
      _
    $region17: #{tpu_custom_call.1} parent=1 // pred_fallthru
      _
    // Predicated region
    $region18: #{tpu_custom_call.1} parent=1 // pred_check
      _
    $region19: #{tpu_custom_call.1} parent=1 // pred_check_branch
      %31 = sbr.rel (0) target = $region21
    $region20: #{tpu_custom_call.1} parent=1 // pred_region
      _
    $region21: #{tpu_custom_call.1} parent=1 // pred_fallthru
      _
    // Predicated region
    $region22: #{tpu_custom_call.1} parent=1 // pred_check
      _
    $region23: #{tpu_custom_call.1} parent=1 // pred_check_branch
      %33 = sbr.rel (0) target = $region25
    $region24: #{tpu_custom_call.1} parent=1 // pred_region
      _
    $region25: #{tpu_custom_call.1} parent=1 // pred_fallthru
      _
    // Predicated region
    $region26: #{tpu_custom_call.1} parent=1 // pred_check
      _
    $region27: #{tpu_custom_call.1} parent=1 // pred_check_branch
      %35 = sbr.rel (0) target = $region29
    $region28: #{tpu_custom_call.1} parent=1 // pred_region
      _
    $region29: #{tpu_custom_call.1} parent=1 // pred_fallthru
      _
    // Predicated region
    $region30: #{tpu_custom_call.1} parent=1 // pred_check
      _
    $region31: #{tpu_custom_call.1} parent=1 // pred_check_branch
      %37 = sbr.rel (0) target = $region33
    $region32: #{tpu_custom_call.1} parent=1 // pred_region
      _
    $region33: #{tpu_custom_call.1} parent=1 // pred_fallthru
      _
    // Predicated region
    $region34: #{tpu_custom_call.1} parent=1 // pred_check
      _
    $region35: #{tpu_custom_call.1} parent=1 // pred_check_branch
      %39 = sbr.rel (0) target = $region37
    $region36: #{tpu_custom_call.1} parent=1 // pred_region
      _
    $region37: #{tpu_custom_call.1} parent=1 // pred_fallthru
      _
    // Predicated region
    $region38: #{tpu_custom_call.1} parent=1 // pred_check
      _
    $region39: #{tpu_custom_call.1} parent=1 // pred_check_branch
      %41 = sbr.rel (0) target = $region41
    $region40: #{tpu_custom_call.1} parent=1 // pred_region
      _
    $region41: #{tpu_custom_call.1} parent=1 // pred_fallthru
      _
    // Predicated region
    $region42: #{tpu_custom_call.1} parent=1 // pred_check
      _
    $region43: #{tpu_custom_call.1} parent=1 // pred_check_branch
      %43 = sbr.rel (0) target = $region45
    $region44: #{tpu_custom_call.1} parent=1 // pred_region
      _
    $region45: #{tpu_custom_call.1} parent=1 // pred_fallthru
      _
    // Predicated region
    $region46: #{tpu_custom_call.1} parent=1 // pred_check
      _
    $region47: #{tpu_custom_call.1} parent=1 // pred_check_branch
      %45 = sbr.rel (0) target = $region49
    $region48: #{tpu_custom_call.1} parent=1 // pred_region
      _
    $region49: #{tpu_custom_call.1} parent=1 // pred_fallthru
      _
    // Predicated region
    $region50: #{tpu_custom_call.1} parent=1 // pred_check
      _
    $region51: #{tpu_custom_call.1} parent=1 // pred_check_branch
      %47 = sbr.rel (0) target = $region53
    $region52: #{tpu_custom_call.1} parent=1 // pred_region
      _
    $region53: #{tpu_custom_call.1} parent=1 // pred_fallthru
      _
    %v48 = vlaneseq
    %v49 = vand.u32 %v48, 127
    %v50 = vld [vmem:[%s0] sm:$0xff]
    %v51 = vld [vmem:[%s0 + $0x8] sm:$0xff]
    %52 = vset.pattern.permute.xlu0 0
    %53 = vperm.xlu0 %52, %v50
    %v54 = vpop.permute.xlu0 %53
    %55 = vset.pattern.permute.xlu0 0
    %56 = vperm.xlu0 %55, %v51
    %v57 = vpop.permute.xlu0 %56
    %vm58 = vcmp.eq.s32.totalorder %v54, %v49
    %vm59 = vcmp.eq.s32.totalorder %v57, %v49
    %v60 = vsel %vm58, 1, 0
    %v61 = vsel %vm59, 1, 0
    %v62 = vcvt.s32.f32 %v60
    %v63 = vcvt.s32.f32 %v61
    %v64 = vld [vmem:[%s1] sm:$0xff]
    %v65 = vld [vmem:[%s1 + $0x8] sm:$0xff]
    %66 = vset.pattern.permute.xlu0 0
    %67 = vperm.xlu0 %66, %v64
    %v68 = vpop.permute.xlu0 %67
    %69 = vset.pattern.permute.xlu0 0
    %70 = vperm.xlu0 %69, %v65
    %v71 = vpop.permute.xlu0 %70
    %vm72 = vcmp.eq.s32.totalorder %v68, %v49
    %vm73 = vcmp.eq.s32.totalorder %v71, %v49
    %v74 = vsel %vm72, 1, 0
    %v75 = vsel %vm73, 1, 0
    %v76 = vcvt.s32.f32 %v74
    %v77 = vcvt.s32.f32 %v75
    %v78 = vld [vmem:[%s2] sm:$0xff]
    %v79 = vld [vmem:[%s2 + $0x8] sm:$0xff]
    %v80 = vld [vmem:[%s3] sm:$0xff]
    %v81 = vld [vmem:[%s3 + $0x8] sm:$0xff]
    %vm82 = vcmask 130048
    %v84 = vsel %vm82, %v76, 0
    %v87 = vsel %vm82, %v77, 0
    %89 = vmatprep.subr.mxu0 0.0
    %90 = vmatpush1.msra.mxu0 %v80
    %91 = vmatprep.subr.mxu0 0.0
    %92 = vmatpush1.msra.mxu0 %v81
    %93 = vmatprep.subr.mxu0 0.0
    %94 = vmatpush1.msra.mxu0 0.0
    %95 = vmatprep.subr.mxu0 0.0
    %96 = vmatpush1.msra.mxu0 0.0
    %97 = vmatprep.subr.mxu0 0.0
    %98 = vmatpush1.msra.mxu0 0.0
    %99 = vmatprep.subr.mxu0 0.0
    %100 = vmatpush1.msra.mxu0 0.0
    %101 = vmatprep.subr.mxu0 0.0
    %102 = vmatpush1.msra.mxu0 0.0
    %103 = vmatprep.subr.mxu0 0.0
    %104 = vmatpush1.msra.mxu0 0.0
    %105 = vmatprep.subr.mxu0 0.0
    %106 = vmatpush1.msra.mxu0 0.0
    %107 = vmatprep.subr.mxu0 0.0
    %108 = vmatpush1.msra.mxu0 0.0
    %109 = vmatprep.subr.mxu0 0.0
    %110 = vmatpush1.msra.mxu0 0.0
    %111 = vmatprep.subr.mxu0 0.0
    %112 = vmatpush1.msra.mxu0 0.0
    %113 = vmatprep.subr.mxu0 0.0
    %114 = vmatpush1.msra.mxu0 0.0
    %115 = vmatprep.subr.mxu0 0.0
    %116 = vmatpush1.msra.mxu0 0.0
    %117 = vmatprep.subr.mxu0 0.0
    %118 = vmatpush1.msra.mxu0 0.0
    %119 = vmatprep.subr.mxu0 0.0
    %120 = vmatpush1.msra.mxu0 0.0
    %121 = vmatprep.subr.mxu0 0.0
    %122 = vmatpush1.msra.mxu0 0.0
    %123 = vmatprep.subr.mxu0 0.0
    %124 = vmatpush1.msra.mxu0 0.0
    %125 = vmatprep.subr.mxu0 0.0
    %126 = vmatpush1.msra.mxu0 0.0
    %127 = vmatprep.subr.mxu0 0.0
    %128 = vmatpush1.msra.mxu0 0.0
    %129 = vmatprep.subr.mxu0 0.0
    %130 = vmatpush1.msra.mxu0 0.0
    %131 = vmatprep.subr.mxu0 0.0
    %132 = vmatpush1.msra.mxu0 0.0
    %133 = vmatprep.subr.mxu0 0.0
    %134 = vmatpush1.msra.mxu0 0.0
    %135 = vmatprep.subr.mxu0 0.0
    %136 = vmatpush1.msra.mxu0 0.0
    %137 = vmatprep.subr.mxu0 0.0
    %138 = vmatpush1.msra.mxu0 0.0
    %139 = vmatprep.subr.mxu0 0.0
    %140 = vmatpush1.msra.mxu0 0.0
    %141 = vmatprep.subr.mxu0 0.0
    %142 = vmatpush1.msra.mxu0 0.0
    %143 = vmatprep.subr.mxu0 0.0
    %144 = vmatpush1.msra.mxu0 0.0
    %145 = vmatprep.subr.mxu0 0.0
    %146 = vmatpush1.msra.mxu0 0.0
    %147 = vmatprep.subr.mxu0 0.0
    %148 = vmatpush1.msra.mxu0 0.0
    %149 = vmatprep.subr.mxu0 0.0
    %150 = vmatpush1.msra.mxu0 0.0
    %151 = vmatprep.subr.mxu0 0.0
    %152 = vmatpush1.msra.mxu0 0.0
    %153 = vmatprep.mubr.f32.mxu0 0.0
    %154 = vmatmul.mubr.f32.gmra.mrb[0].mxu0 %v84
    %v155 = vpop.f32.mrb[0].mxu0
    %v156 = vadd.f32 0.0, %v155
    %v157 = vpop.f32.mrb[0].mxu0
    %158 = vmatprep.mubr.f32.mxu0 0.0
    %159 = vmatmul.mubr.f32.gmra.mrb[0].mxu0 %v87
    %v160 = vpop.f32.mrb[0].mxu0
    %v161 = vadd.f32 0.0, %v160
    %v162 = vpop.f32.mrb[0].mxu0
    %163 = vdwg.mxu0
    %v165 = vsel %vm82, %v62, 0
    %v168 = vsel %vm82, %v63, 0
    %170 = vmatprep.subr.mxu0 0.0
    %171 = vmatpush1.msra.mxu0 %v78
    %172 = vmatprep.subr.mxu0 0.0
    %173 = vmatpush1.msra.mxu0 %v79
    %174 = vmatprep.subr.mxu0 0.0
    %175 = vmatpush1.msra.mxu0 0.0
    %176 = vmatprep.subr.mxu0 0.0
    %177 = vmatpush1.msra.mxu0 0.0
    %178 = vmatprep.subr.mxu0 0.0
    %179 = vmatpush1.msra.mxu0 0.0
    %180 = vmatprep.subr.mxu0 0.0
    %181 = vmatpush1.msra.mxu0 0.0
    %182 = vmatprep.subr.mxu0 0.0
    %183 = vmatpush1.msra.mxu0 0.0
    %184 = vmatprep.subr.mxu0 0.0
    %185 = vmatpush1.msra.mxu0 0.0
    %186 = vmatprep.subr.mxu0 0.0
    %187 = vmatpush1.msra.mxu0 0.0
    %188 = vmatprep.subr.mxu0 0.0
    %189 = vmatpush1.msra.mxu0 0.0
    %190 = vmatprep.subr.mxu0 0.0
    %191 = vmatpush1.msra.mxu0 0.0
    %192 = vmatprep.subr.mxu0 0.0
    %193 = vmatpush1.msra.mxu0 0.0
    %194 = vmatprep.subr.mxu0 0.0
    %195 = vmatpush1.msra.mxu0 0.0
    %196 = vmatprep.subr.mxu0 0.0
    %197 = vmatpush1.msra.mxu0 0.0
    %198 = vmatprep.subr.mxu0 0.0
    %199 = vmatpush1.msra.mxu0 0.0
    %200 = vmatprep.subr.mxu0 0.0
    %201 = vmatpush1.msra.mxu0 0.0
    %202 = vmatprep.subr.mxu0 0.0
    %203 = vmatpush1.msra.mxu0 0.0
    %204 = vmatprep.subr.mxu0 0.0
    %205 = vmatpush1.msra.mxu0 0.0
    %206 = vmatprep.subr.mxu0 0.0
    %207 = vmatpush1.msra.mxu0 0.0
    %208 = vmatprep.subr.mxu0 0.0
    %209 = vmatpush1.msra.mxu0 0.0
    %210 = vmatprep.subr.mxu0 0.0
    %211 = vmatpush1.msra.mxu0 0.0
    %212 = vmatprep.subr.mxu0 0.0
    %213 = vmatpush1.msra.mxu0 0.0
    %214 = vmatprep.subr.mxu0 0.0
    %215 = vmatpush1.msra.mxu0 0.0
    %216 = vmatprep.subr.mxu0 0.0
    %217 = vmatpush1.msra.mxu0 0.0
    %218 = vmatprep.subr.mxu0 0.0
    %219 = vmatpush1.msra.mxu0 0.0
    %220 = vmatprep.subr.mxu0 0.0
    %221 = vmatpush1.msra.mxu0 0.0
    %222 = vmatprep.subr.mxu0 0.0
    %223 = vmatpush1.msra.mxu0 0.0
    %224 = vmatprep.subr.mxu0 0.0
    %225 = vmatpush1.msra.mxu0 0.0
    %226 = vmatprep.subr.mxu0 0.0
    %227 = vmatpush1.msra.mxu0 0.0
    %228 = vmatprep.subr.mxu0 0.0
    %229 = vmatpush1.msra.mxu0 0.0
    %230 = vmatprep.subr.mxu0 0.0
    %231 = vmatpush1.msra.mxu0 0.0
    %232 = vmatprep.subr.mxu0 0.0
    %233 = vmatpush1.msra.mxu0 0.0
    %234 = vmatprep.mubr.f32.mxu0 0.0
    %235 = vmatmul.mubr.f32.gmra.mrb[0].mxu0 %v165
    %v236 = vpop.f32.mrb[0].mxu0
    %v237 = vadd.f32 %v156, %v236
    %v238 = vpop.f32.mrb[0].mxu0
    %239 = vmatprep.mubr.f32.mxu0 0.0
    %240 = vmatmul.mubr.f32.gmra.mrb[0].mxu0 %v168
    %v241 = vpop.f32.mrb[0].mxu0
    %v242 = vadd.f32 %v161, %v241
    %v243 = vpop.f32.mrb[0].mxu0
    %244 = vdwg.mxu0
    %v245 = vld [vmem:[%s4] sm:$0x1]
    %v247 = vlaneseq
    %v248 = vshrl.u32 %v247, 7
    %v249 = vsub.s32 0, %v248
    %v250 = vrot.slane %v245, %v249
    %v252 = vadd.f32 %v237, %v250
    %v253 = vadd.f32 %v242, %v250
    %v254 = vld [vmem:[%s5] sm:$0xff]
    %v255 = vld [vmem:[%s5 + $0x8] sm:$0x3]
    %vm256 = vcmask 80896
    %v258 = vsel %vm256, 0.0, 0
    %vm260 = vcmask 1041408
    %v262 = vsel %vm260, %v255, 0
    %264 = vmatprep.subr.mxu0 0.0
    %265 = vmatpush1.msra.mxu0 %v254
    %266 = vmatprep.subr.mxu0 0.0
    %267 = vmatpush1.msra.mxu0 %v262
    %268 = vmatprep.subr.mxu0 0.0
    %269 = vmatpush1.msra.mxu0 0.0
    %270 = vmatprep.subr.mxu0 0.0
    %271 = vmatpush1.msra.mxu0 0.0
    %272 = vmatprep.subr.mxu0 0.0
    %273 = vmatpush1.msra.mxu0 0.0
    %274 = vmatprep.subr.mxu0 0.0
    %275 = vmatpush1.msra.mxu0 0.0
    %276 = vmatprep.subr.mxu0 0.0
    %277 = vmatpush1.msra.mxu0 0.0
    %278 = vmatprep.subr.mxu0 0.0
    %279 = vmatpush1.msra.mxu0 0.0
    %280 = vmatprep.subr.mxu0 0.0
    %281 = vmatpush1.msra.mxu0 0.0
    %282 = vmatprep.subr.mxu0 0.0
    %283 = vmatpush1.msra.mxu0 0.0
    %284 = vmatprep.subr.mxu0 0.0
    %285 = vmatpush1.msra.mxu0 0.0
    %286 = vmatprep.subr.mxu0 0.0
    %287 = vmatpush1.msra.mxu0 0.0
    %288 = vmatprep.subr.mxu0 0.0
    %289 = vmatpush1.msra.mxu0 0.0
    %290 = vmatprep.subr.mxu0 0.0
    %291 = vmatpush1.msra.mxu0 0.0
    %292 = vmatprep.subr.mxu0 0.0
    %293 = vmatpush1.msra.mxu0 0.0
    %294 = vmatprep.subr.mxu0 0.0
    %295 = vmatpush1.msra.mxu0 0.0
    %296 = vmatprep.subr.mxu0 0.0
    %297 = vmatpush1.msra.mxu0 0.0
    %298 = vmatprep.subr.mxu0 0.0
    %299 = vmatpush1.msra.mxu0 0.0
    %300 = vmatprep.subr.mxu0 0.0
    %301 = vmatpush1.msra.mxu0 0.0
    %302 = vmatprep.subr.mxu0 0.0
    %303 = vmatpush1.msra.mxu0 0.0
    %304 = vmatprep.subr.mxu0 0.0
    %305 = vmatpush1.msra.mxu0 0.0
    %306 = vmatprep.subr.mxu0 0.0
    %307 = vmatpush1.msra.mxu0 0.0
    %308 = vmatprep.subr.mxu0 0.0
    %309 = vmatpush1.msra.mxu0 0.0
    %310 = vmatprep.subr.mxu0 0.0
    %311 = vmatpush1.msra.mxu0 0.0
    %312 = vmatprep.subr.mxu0 0.0
    %313 = vmatpush1.msra.mxu0 0.0
    %314 = vmatprep.subr.mxu0 0.0
    %315 = vmatpush1.msra.mxu0 0.0
    %316 = vmatprep.subr.mxu0 0.0
    %317 = vmatpush1.msra.mxu0 0.0
    %318 = vmatprep.subr.mxu0 0.0
    %319 = vmatpush1.msra.mxu0 0.0
    %320 = vmatprep.subr.mxu0 0.0
    %321 = vmatpush1.msra.mxu0 0.0
    %322 = vmatprep.subr.mxu0 0.0
    %323 = vmatpush1.msra.mxu0 0.0
    %324 = vmatprep.subr.mxu0 0.0
    %325 = vmatpush1.msra.mxu0 0.0
    %326 = vmatprep.subr.mxu0 0.0
    %327 = vmatpush1.msra.mxu0 0.0
    %328 = vmatprep.mubr.f32.mxu0 0.0
    %329 = vmatmul.mubr.f32.gmra.mrb[0].mxu0 %v258
    %v330 = vpop.f32.mrb[0].mxu0
    %v331 = vadd.f32 0.0, %v330
    %v332 = vpop.f32.mrb[0].mxu0
    %333 = vdwg.mxu0
    %v334 = vadd.f32 %v252, %v331
    %v335 = vxor.u32 %v334, 2147483648
    %v336 = vmul.f32 %v335, 1.442695
    %v337 = vpow.pop %v336
    %v338 = vadd.f32 %v337, 1.0
    %v339 = vrcp.pop %v338
    %v340 = vmul.f32 1.0, %v339
    %v341 = vtanh.pop %v334
    %v342 = vmul.f32 %v340, 0.0
    %344 = vrot.lane.b32.xlu0 %v341, 108
    %v345 = vpop.permute.xlu0 %344
    %v347 = vmul.f32 %v340, %v345
    %349 = vrot.lane.b32.xlu0 %v347, 10
    %v350 = vpop.permute.xlu0 %349
    %v352 = vadd.f32 %v342, %v350
    %v353 = vtanh.pop %v352
    %355 = vrot.lane.b32.xlu0 %v353, 20
    %v356 = vpop.permute.xlu0 %355
    %v358 = vmul.f32 %v340, %v356
    %360 = vrot.lane.b32.xlu0 %v358, 98
    %v361 = vpop.permute.xlu0 %360
    %v362 = vsel %vm256, %v361, 0
    %364 = vmatprep.subr.mxu0 0.0
    %365 = vmatpush1.msra.mxu0 %v254
    %366 = vmatprep.subr.mxu0 0.0
    %367 = vmatpush1.msra.mxu0 %v262
    %368 = vmatprep.subr.mxu0 0.0
    %369 = vmatpush1.msra.mxu0 0.0
    %370 = vmatprep.subr.mxu0 0.0
    %371 = vmatpush1.msra.mxu0 0.0
    %372 = vmatprep.subr.mxu0 0.0
    %373 = vmatpush1.msra.mxu0 0.0
    %374 = vmatprep.subr.mxu0 0.0
    %375 = vmatpush1.msra.mxu0 0.0
    %376 = vmatprep.subr.mxu0 0.0
    %377 = vmatpush1.msra.mxu0 0.0
    %378 = vmatprep.subr.mxu0 0.0
    %379 = vmatpush1.msra.mxu0 0.0
    %380 = vmatprep.subr.mxu0 0.0
    %381 = vmatpush1.msra.mxu0 0.0
    %382 = vmatprep.subr.mxu0 0.0
    %383 = vmatpush1.msra.mxu0 0.0
    %384 = vmatprep.subr.mxu0 0.0
    %385 = vmatpush1.msra.mxu0 0.0
    %386 = vmatprep.subr.mxu0 0.0
    %387 = vmatpush1.msra.mxu0 0.0
    %388 = vmatprep.subr.mxu0 0.0
    %389 = vmatpush1.msra.mxu0 0.0
    %390 = vmatprep.subr.mxu0 0.0
    %391 = vmatpush1.msra.mxu0 0.0
    %392 = vmatprep.subr.mxu0 0.0
    %393 = vmatpush1.msra.mxu0 0.0
    %394 = vmatprep.subr.mxu0 0.0
    %395 = vmatpush1.msra.mxu0 0.0
    %396 = vmatprep.subr.mxu0 0.0
    %397 = vmatpush1.msra.mxu0 0.0
    %398 = vmatprep.subr.mxu0 0.0
    %399 = vmatpush1.msra.mxu0 0.0
    %400 = vmatprep.subr.mxu0 0.0
    %401 = vmatpush1.msra.mxu0 0.0
    %402 = vmatprep.subr.mxu0 0.0
    %403 = vmatpush1.msra.mxu0 0.0
    %404 = vmatprep.subr.mxu0 0.0
    %405 = vmatpush1.msra.mxu0 0.0
    %406 = vmatprep.subr.mxu0 0.0
    %407 = vmatpush1.msra.mxu0 0.0
    %408 = vmatprep.subr.mxu0 0.0
    %409 = vmatpush1.msra.mxu0 0.0
    %410 = vmatprep.subr.mxu0 0.0
    %411 = vmatpush1.msra.mxu0 0.0
    %412 = vmatprep.subr.mxu0 0.0
    %413 = vmatpush1.msra.mxu0 0.0
    %414 = vmatprep.subr.mxu0 0.0
    %415 = vmatpush1.msra.mxu0 0.0
    %416 = vmatprep.subr.mxu0 0.0
    %417 = vmatpush1.msra.mxu0 0.0
    %418 = vmatprep.subr.mxu0 0.0
    %419 = vmatpush1.msra.mxu0 0.0
    %420 = vmatprep.subr.mxu0 0.0
    %421 = vmatpush1.msra.mxu0 0.0
    %422 = vmatprep.subr.mxu0 0.0
    %423 = vmatpush1.msra.mxu0 0.0
    %424 = vmatprep.subr.mxu0 0.0
    %425 = vmatpush1.msra.mxu0 0.0
    %426 = vmatprep.subr.mxu0 0.0
    %427 = vmatpush1.msra.mxu0 0.0
    %428 = vmatprep.mubr.f32.mxu0 0.0
    %429 = vmatmul.mubr.f32.gmra.mrb[0].mxu0 %v362
    %v430 = vpop.f32.mrb[0].mxu0
    %v431 = vadd.f32 0.0, %v430
    %v432 = vpop.f32.mrb[0].mxu0
    %433 = vdwg.mxu0
    %v435 = vrot.slane %v431, 6
    %v437 = vadd.f32 %v252, %v435
    %v438 = vxor.u32 %v437, 2147483648
    %v439 = vmul.f32 %v438, 1.442695
    %v440 = vpow.pop %v439
    %v441 = vadd.f32 %v440, 1.0
    %v442 = vrcp.pop %v441
    %v443 = vmul.f32 1.0, %v442
    %v444 = vtanh.pop %v437
    %v446 = vrot.slane %v352, 6
    %v448 = vmul.f32 %v443, %v446
    %450 = vrot.lane.b32.xlu0 %v444, 108
    %v451 = vpop.permute.xlu0 %450
    %v453 = vmul.f32 %v443, %v451
    %455 = vrot.lane.b32.xlu0 %v453, 10
    %v456 = vpop.permute.xlu0 %455
    %v458 = vadd.f32 %v448, %v456
    %v459 = vtanh.pop %v458
    %461 = vrot.lane.b32.xlu0 %v459, 20
    %v462 = vpop.permute.xlu0 %461
    %v464 = vmul.f32 %v443, %v462
    %v466 = vrot.slane %v464, 2
    %467 = vrot.lane.b32.xlu0 %v466, 98
    %v468 = vpop.permute.xlu0 %467
    %v469 = vsel %vm256, %v468, 0
    %471 = vmatprep.subr.mxu0 0.0
    %472 = vmatpush1.msra.mxu0 %v254
    %473 = vmatprep.subr.mxu0 0.0
    %474 = vmatpush1.msra.mxu0 %v262
    %475 = vmatprep.subr.mxu0 0.0
    %476 = vmatpush1.msra.mxu0 0.0
    %477 = vmatprep.subr.mxu0 0.0
    %478 = vmatpush1.msra.mxu0 0.0
    %479 = vmatprep.subr.mxu0 0.0
    %480 = vmatpush1.msra.mxu0 0.0
    %481 = vmatprep.subr.mxu0 0.0
    %482 = vmatpush1.msra.mxu0 0.0
    %483 = vmatprep.subr.mxu0 0.0
    %484 = vmatpush1.msra.mxu0 0.0
    %485 = vmatprep.subr.mxu0 0.0
    %486 = vmatpush1.msra.mxu0 0.0
    %487 = vmatprep.subr.mxu0 0.0
    %488 = vmatpush1.msra.mxu0 0.0
    %489 = vmatprep.subr.mxu0 0.0
    %490 = vmatpush1.msra.mxu0 0.0
    %491 = vmatprep.subr.mxu0 0.0
    %492 = vmatpush1.msra.mxu0 0.0
    %493 = vmatprep.subr.mxu0 0.0
    %494 = vmatpush1.msra.mxu0 0.0
    %495 = vmatprep.subr.mxu0 0.0
    %496 = vmatpush1.msra.mxu0 0.0
    %497 = vmatprep.subr.mxu0 0.0
    %498 = vmatpush1.msra.mxu0 0.0
    %499 = vmatprep.subr.mxu0 0.0
    %500 = vmatpush1.msra.mxu0 0.0
    %501 = vmatprep.subr.mxu0 0.0
    %502 = vmatpush1.msra.mxu0 0.0
    %503 = vmatprep.subr.mxu0 0.0
    %504 = vmatpush1.msra.mxu0 0.0
    %505 = vmatprep.subr.mxu0 0.0
    %506 = vmatpush1.msra.mxu0 0.0
    %507 = vmatprep.subr.mxu0 0.0
    %508 = vmatpush1.msra.mxu0 0.0
    %509 = vmatprep.subr.mxu0 0.0
    %510 = vmatpush1.msra.mxu0 0.0
    %511 = vmatprep.subr.mxu0 0.0
    %512 = vmatpush1.msra.mxu0 0.0
    %513 = vmatprep.subr.mxu0 0.0
    %514 = vmatpush1.msra.mxu0 0.0
    %515 = vmatprep.subr.mxu0 0.0
    %516 = vmatpush1.msra.mxu0 0.0
    %517 = vmatprep.subr.mxu0 0.0
    %518 = vmatpush1.msra.mxu0 0.0
    %519 = vmatprep.subr.mxu0 0.0
    %520 = vmatpush1.msra.mxu0 0.0
    %521 = vmatprep.subr.mxu0 0.0
    %522 = vmatpush1.msra.mxu0 0.0
    %523 = vmatprep.subr.mxu0 0.0
    %524 = vmatpush1.msra.mxu0 0.0
    %525 = vmatprep.subr.mxu0 0.0
    %526 = vmatpush1.msra.mxu0 0.0
    %527 = vmatprep.subr.mxu0 0.0
    %528 = vmatpush1.msra.mxu0 0.0
    %529 = vmatprep.subr.mxu0 0.0
    %530 = vmatpush1.msra.mxu0 0.0
    %531 = vmatprep.subr.mxu0 0.0
    %532 = vmatpush1.msra.mxu0 0.0
    %533 = vmatprep.subr.mxu0 0.0
    %534 = vmatpush1.msra.mxu0 0.0
    %535 = vmatprep.mubr.f32.mxu0 0.0
    %536 = vmatmul.mubr.f32.gmra.mrb[0].mxu0 %v469
    %v537 = vpop.f32.mrb[0].mxu0
    %v538 = vadd.f32 0.0, %v537
    %v539 = vpop.f32.mrb[0].mxu0
    %540 = vdwg.mxu0
    %v542 = vrot.slane %v538, 4
    %v544 = vadd.f32 %v252, %v542
    %v545 = vxor.u32 %v544, 2147483648
    %v546 = vmul.f32 %v545, 1.442695
    %v547 = vpow.pop %v546
    %v548 = vadd.f32 %v547, 1.0
    %v549 = vrcp.pop %v548
    %v550 = vmul.f32 1.0, %v549
    %v551 = vtanh.pop %v544
    %v553 = vrot.slane %v458, 6
    %v555 = vmul.f32 %v550, %v553
    %557 = vrot.lane.b32.xlu0 %v551, 108
    %v558 = vpop.permute.xlu0 %557
    %v560 = vmul.f32 %v550, %v558
    %562 = vrot.lane.b32.xlu0 %v560, 10
    %v563 = vpop.permute.xlu0 %562
    %v565 = vadd.f32 %v555, %v563
    %v566 = vtanh.pop %v565
    %568 = vrot.lane.b32.xlu0 %v566, 20
    %v569 = vpop.permute.xlu0 %568
    %v571 = vmul.f32 %v550, %v569
    %v573 = vrot.slane %v571, 4
    %574 = vrot.lane.b32.xlu0 %v573, 98
    %v575 = vpop.permute.xlu0 %574
    %v576 = vsel %vm256, %v575, 0
    %578 = vmatprep.subr.mxu0 0.0
    %579 = vmatpush1.msra.mxu0 %v254
    %580 = vmatprep.subr.mxu0 0.0
    %581 = vmatpush1.msra.mxu0 %v262
    %582 = vmatprep.subr.mxu0 0.0
    %583 = vmatpush1.msra.mxu0 0.0
    %584 = vmatprep.subr.mxu0 0.0
    %585 = vmatpush1.msra.mxu0 0.0
    %586 = vmatprep.subr.mxu0 0.0
    %587 = vmatpush1.msra.mxu0 0.0
    %588 = vmatprep.subr.mxu0 0.0
    %589 = vmatpush1.msra.mxu0 0.0
    %590 = vmatprep.subr.mxu0 0.0
    %591 = vmatpush1.msra.mxu0 0.0
    %592 = vmatprep.subr.mxu0 0.0
    %593 = vmatpush1.msra.mxu0 0.0
    %594 = vmatprep.subr.mxu0 0.0
    %595 = vmatpush1.msra.mxu0 0.0
    %596 = vmatprep.subr.mxu0 0.0
    %597 = vmatpush1.msra.mxu0 0.0
    %598 = vmatprep.subr.mxu0 0.0
    %599 = vmatpush1.msra.mxu0 0.0
    %600 = vmatprep.subr.mxu0 0.0
    %601 = vmatpush1.msra.mxu0 0.0
    %602 = vmatprep.subr.mxu0 0.0
    %603 = vmatpush1.msra.mxu0 0.0
    %604 = vmatprep.subr.mxu0 0.0
    %605 = vmatpush1.msra.mxu0 0.0
    %606 = vmatprep.subr.mxu0 0.0
    %607 = vmatpush1.msra.mxu0 0.0
    %608 = vmatprep.subr.mxu0 0.0
    %609 = vmatpush1.msra.mxu0 0.0
    %610 = vmatprep.subr.mxu0 0.0
    %611 = vmatpush1.msra.mxu0 0.0
    %612 = vmatprep.subr.mxu0 0.0
    %613 = vmatpush1.msra.mxu0 0.0
    %614 = vmatprep.subr.mxu0 0.0
    %615 = vmatpush1.msra.mxu0 0.0
    %616 = vmatprep.subr.mxu0 0.0
    %617 = vmatpush1.msra.mxu0 0.0
    %618 = vmatprep.subr.mxu0 0.0
    %619 = vmatpush1.msra.mxu0 0.0
    %620 = vmatprep.subr.mxu0 0.0
    %621 = vmatpush1.msra.mxu0 0.0
    %622 = vmatprep.subr.mxu0 0.0
    %623 = vmatpush1.msra.mxu0 0.0
    %624 = vmatprep.subr.mxu0 0.0
    %625 = vmatpush1.msra.mxu0 0.0
    %626 = vmatprep.subr.mxu0 0.0
    %627 = vmatpush1.msra.mxu0 0.0
    %628 = vmatprep.subr.mxu0 0.0
    %629 = vmatpush1.msra.mxu0 0.0
    %630 = vmatprep.subr.mxu0 0.0
    %631 = vmatpush1.msra.mxu0 0.0
    %632 = vmatprep.subr.mxu0 0.0
    %633 = vmatpush1.msra.mxu0 0.0
    %634 = vmatprep.subr.mxu0 0.0
    %635 = vmatpush1.msra.mxu0 0.0
    %636 = vmatprep.subr.mxu0 0.0
    %637 = vmatpush1.msra.mxu0 0.0
    %638 = vmatprep.subr.mxu0 0.0
    %639 = vmatpush1.msra.mxu0 0.0
    %640 = vmatprep.subr.mxu0 0.0
    %641 = vmatpush1.msra.mxu0 0.0
    %642 = vmatprep.mubr.f32.mxu0 0.0
    %643 = vmatmul.mubr.f32.gmra.mrb[0].mxu0 %v576
    %v644 = vpop.f32.mrb[0].mxu0
    %v645 = vadd.f32 0.0, %v644
    %v646 = vpop.f32.mrb[0].mxu0
    %647 = vdwg.mxu0
    %v649 = vrot.slane %v645, 2
    %v651 = vadd.f32 %v252, %v649
    %v652 = vxor.u32 %v651, 2147483648
    %v653 = vmul.f32 %v652, 1.442695
    %v654 = vpow.pop %v653
    %v655 = vadd.f32 %v654, 1.0
    %v656 = vrcp.pop %v655
    %v657 = vmul.f32 1.0, %v656
    %v658 = vtanh.pop %v651
    %v660 = vrot.slane %v565, 6
    %v662 = vmul.f32 %v657, %v660
    %664 = vrot.lane.b32.xlu0 %v658, 108
    %v665 = vpop.permute.xlu0 %664
    %v667 = vmul.f32 %v657, %v665
    %669 = vrot.lane.b32.xlu0 %v667, 10
    %v670 = vpop.permute.xlu0 %669
    %v672 = vadd.f32 %v662, %v670
    %v673 = vtanh.pop %v672
    %675 = vrot.lane.b32.xlu0 %v673, 20
    %v676 = vpop.permute.xlu0 %675
    %v678 = vmul.f32 %v657, %v676
    %v680 = vrot.slane %v678, 6
    %681 = vrot.lane.b32.xlu0 %v680, 98
    %v682 = vpop.permute.xlu0 %681
    %v683 = vsel %vm256, %v682, 0
    %685 = vmatprep.subr.mxu0 0.0
    %686 = vmatpush1.msra.mxu0 %v254
    %687 = vmatprep.subr.mxu0 0.0
    %688 = vmatpush1.msra.mxu0 %v262
    %689 = vmatprep.subr.mxu0 0.0
    %690 = vmatpush1.msra.mxu0 0.0
    %691 = vmatprep.subr.mxu0 0.0
    %692 = vmatpush1.msra.mxu0 0.0
    %693 = vmatprep.subr.mxu0 0.0
    %694 = vmatpush1.msra.mxu0 0.0
    %695 = vmatprep.subr.mxu0 0.0
    %696 = vmatpush1.msra.mxu0 0.0
    %697 = vmatprep.subr.mxu0 0.0
    %698 = vmatpush1.msra.mxu0 0.0
    %699 = vmatprep.subr.mxu0 0.0
    %700 = vmatpush1.msra.mxu0 0.0
    %701 = vmatprep.subr.mxu0 0.0
    %702 = vmatpush1.msra.mxu0 0.0
    %703 = vmatprep.subr.mxu0 0.0
    %704 = vmatpush1.msra.mxu0 0.0
    %705 = vmatprep.subr.mxu0 0.0
    %706 = vmatpush1.msra.mxu0 0.0
    %707 = vmatprep.subr.mxu0 0.0
    %708 = vmatpush1.msra.mxu0 0.0
    %709 = vmatprep.subr.mxu0 0.0
    %710 = vmatpush1.msra.mxu0 0.0
    %711 = vmatprep.subr.mxu0 0.0
    %712 = vmatpush1.msra.mxu0 0.0
    %713 = vmatprep.subr.mxu0 0.0
    %714 = vmatpush1.msra.mxu0 0.0
    %715 = vmatprep.subr.mxu0 0.0
    %716 = vmatpush1.msra.mxu0 0.0
    %717 = vmatprep.subr.mxu0 0.0
    %718 = vmatpush1.msra.mxu0 0.0
    %719 = vmatprep.subr.mxu0 0.0
    %720 = vmatpush1.msra.mxu0 0.0
    %721 = vmatprep.subr.mxu0 0.0
    %722 = vmatpush1.msra.mxu0 0.0
    %723 = vmatprep.subr.mxu0 0.0
    %724 = vmatpush1.msra.mxu0 0.0
    %725 = vmatprep.subr.mxu0 0.0
    %726 = vmatpush1.msra.mxu0 0.0
    %727 = vmatprep.subr.mxu0 0.0
    %728 = vmatpush1.msra.mxu0 0.0
    %729 = vmatprep.subr.mxu0 0.0
    %730 = vmatpush1.msra.mxu0 0.0
    %731 = vmatprep.subr.mxu0 0.0
    %732 = vmatpush1.msra.mxu0 0.0
    %733 = vmatprep.subr.mxu0 0.0
    %734 = vmatpush1.msra.mxu0 0.0
    %735 = vmatprep.subr.mxu0 0.0
    %736 = vmatpush1.msra.mxu0 0.0
    %737 = vmatprep.subr.mxu0 0.0
    %738 = vmatpush1.msra.mxu0 0.0
    %739 = vmatprep.subr.mxu0 0.0
    %740 = vmatpush1.msra.mxu0 0.0
    %741 = vmatprep.subr.mxu0 0.0
    %742 = vmatpush1.msra.mxu0 0.0
    %743 = vmatprep.subr.mxu0 0.0
    %744 = vmatpush1.msra.mxu0 0.0
    %745 = vmatprep.subr.mxu0 0.0
    %746 = vmatpush1.msra.mxu0 0.0
    %747 = vmatprep.subr.mxu0 0.0
    %748 = vmatpush1.msra.mxu0 0.0
    %749 = vmatprep.mubr.f32.mxu0 0.0
    %750 = vmatmul.mubr.f32.gmra.mrb[0].mxu0 %v683
    %v751 = vpop.f32.mrb[0].mxu0
    %v752 = vadd.f32 0.0, %v751
    %v753 = vpop.f32.mrb[0].mxu0
    %754 = vdwg.mxu0
    %v755 = vadd.f32 %v253, %v752
    %v756 = vxor.u32 %v755, 2147483648
    %v757 = vmul.f32 %v756, 1.442695
    %v758 = vpow.pop %v757
    %v759 = vadd.f32 %v758, 1.0
    %v760 = vrcp.pop %v759
    %v761 = vmul.f32 1.0, %v760
    %v762 = vtanh.pop %v755
    %v764 = vrot.slane %v672, 6
    %v766 = vmul.f32 %v761, %v764
    %768 = vrot.lane.b32.xlu0 %v762, 108
    %v769 = vpop.permute.xlu0 %768
    %v771 = vmul.f32 %v761, %v769
    %773 = vrot.lane.b32.xlu0 %v771, 10
    %v774 = vpop.permute.xlu0 %773
    %v776 = vadd.f32 %v766, %v774
    %v777 = vtanh.pop %v776
    %779 = vrot.lane.b32.xlu0 %v777, 20
    %v780 = vpop.permute.xlu0 %779
    %v782 = vmul.f32 %v761, %v780
    %784 = vrot.lane.b32.xlu0 %v782, 98
    %v785 = vpop.permute.xlu0 %784
    %v786 = vsel %vm256, %v785, 0
    %788 = vmatprep.subr.mxu0 0.0
    %789 = vmatpush1.msra.mxu0 %v254
    %790 = vmatprep.subr.mxu0 0.0
    %791 = vmatpush1.msra.mxu0 %v262
    %792 = vmatprep.subr.mxu0 0.0
    %793 = vmatpush1.msra.mxu0 0.0
    %794 = vmatprep.subr.mxu0 0.0
    %795 = vmatpush1.msra.mxu0 0.0
    %796 = vmatprep.subr.mxu0 0.0
    %797 = vmatpush1.msra.mxu0 0.0
    %798 = vmatprep.subr.mxu0 0.0
    %799 = vmatpush1.msra.mxu0 0.0
    %800 = vmatprep.subr.mxu0 0.0
    %801 = vmatpush1.msra.mxu0 0.0
    %802 = vmatprep.subr.mxu0 0.0
    %803 = vmatpush1.msra.mxu0 0.0
    %804 = vmatprep.subr.mxu0 0.0
    %805 = vmatpush1.msra.mxu0 0.0
    %806 = vmatprep.subr.mxu0 0.0
    %807 = vmatpush1.msra.mxu0 0.0
    %808 = vmatprep.subr.mxu0 0.0
    %809 = vmatpush1.msra.mxu0 0.0
    %810 = vmatprep.subr.mxu0 0.0
    %811 = vmatpush1.msra.mxu0 0.0
    %812 = vmatprep.subr.mxu0 0.0
    %813 = vmatpush1.msra.mxu0 0.0
    %814 = vmatprep.subr.mxu0 0.0
    %815 = vmatpush1.msra.mxu0 0.0
    %816 = vmatprep.subr.mxu0 0.0
    %817 = vmatpush1.msra.mxu0 0.0
    %818 = vmatprep.subr.mxu0 0.0
    %819 = vmatpush1.msra.mxu0 0.0
    %820 = vmatprep.subr.mxu0 0.0
    %821 = vmatpush1.msra.mxu0 0.0
    %822 = vmatprep.subr.mxu0 0.0
    %823 = vmatpush1.msra.mxu0 0.0
    %824 = vmatprep.subr.mxu0 0.0
    %825 = vmatpush1.msra.mxu0 0.0
    %826 = vmatprep.subr.mxu0 0.0
    %827 = vmatpush1.msra.mxu0 0.0
    %828 = vmatprep.subr.mxu0 0.0
    %829 = vmatpush1.msra.mxu0 0.0
    %830 = vmatprep.subr.mxu0 0.0
    %831 = vmatpush1.msra.mxu0 0.0
    %832 = vmatprep.subr.mxu0 0.0
    %833 = vmatpush1.msra.mxu0 0.0
    %834 = vmatprep.subr.mxu0 0.0
    %835 = vmatpush1.msra.mxu0 0.0
    %836 = vmatprep.subr.mxu0 0.0
    %837 = vmatpush1.msra.mxu0 0.0
    %838 = vmatprep.subr.mxu0 0.0
    %839 = vmatpush1.msra.mxu0 0.0
    %840 = vmatprep.subr.mxu0 0.0
    %841 = vmatpush1.msra.mxu0 0.0
    %842 = vmatprep.subr.mxu0 0.0
    %843 = vmatpush1.msra.mxu0 0.0
    %844 = vmatprep.subr.mxu0 0.0
    %845 = vmatpush1.msra.mxu0 0.0
    %846 = vmatprep.subr.mxu0 0.0
    %847 = vmatpush1.msra.mxu0 0.0
    %848 = vmatprep.subr.mxu0 0.0
    %849 = vmatpush1.msra.mxu0 0.0
    %850 = vmatprep.subr.mxu0 0.0
    %851 = vmatpush1.msra.mxu0 0.0
    %852 = vmatprep.mubr.f32.mxu0 0.0
    %853 = vmatmul.mubr.f32.gmra.mrb[0].mxu0 %v786
    %v854 = vpop.f32.mrb[0].mxu0
    %v855 = vadd.f32 0.0, %v854
    %v856 = vpop.f32.mrb[0].mxu0
    %857 = vdwg.mxu0
    %v859 = vrot.slane %v855, 6
    %v861 = vadd.f32 %v253, %v859
    %v862 = vxor.u32 %v861, 2147483648
    %v863 = vmul.f32 %v862, 1.442695
    %v864 = vpow.pop %v863
    %v865 = vadd.f32 %v864, 1.0
    %v866 = vrcp.pop %v865
    %v867 = vmul.f32 1.0, %v866
    %v868 = vtanh.pop %v861
    %v870 = vrot.slane %v776, 6
    %v872 = vmul.f32 %v867, %v870
    %874 = vrot.lane.b32.xlu0 %v868, 108
    %v875 = vpop.permute.xlu0 %874
    %v877 = vmul.f32 %v867, %v875
    %879 = vrot.lane.b32.xlu0 %v877, 10
    %v880 = vpop.permute.xlu0 %879
    %v882 = vadd.f32 %v872, %v880
    %v883 = vtanh.pop %v882
    %885 = vrot.lane.b32.xlu0 %v883, 20
    %v886 = vpop.permute.xlu0 %885
    %v888 = vmul.f32 %v867, %v886
    %v890 = vrot.slane %v888, 2
    %891 = vrot.lane.b32.xlu0 %v890, 98
    %v892 = vpop.permute.xlu0 %891
    %v893 = vsel %vm256, %v892, 0
    %895 = vmatprep.subr.mxu0 0.0
    %896 = vmatpush1.msra.mxu0 %v254
    %897 = vmatprep.subr.mxu0 0.0
    %898 = vmatpush1.msra.mxu0 %v262
    %899 = vmatprep.subr.mxu0 0.0
    %900 = vmatpush1.msra.mxu0 0.0
    %901 = vmatprep.subr.mxu0 0.0
    %902 = vmatpush1.msra.mxu0 0.0
    %903 = vmatprep.subr.mxu0 0.0
    %904 = vmatpush1.msra.mxu0 0.0
    %905 = vmatprep.subr.mxu0 0.0
    %906 = vmatpush1.msra.mxu0 0.0
    %907 = vmatprep.subr.mxu0 0.0
    %908 = vmatpush1.msra.mxu0 0.0
    %909 = vmatprep.subr.mxu0 0.0
    %910 = vmatpush1.msra.mxu0 0.0
    %911 = vmatprep.subr.mxu0 0.0
    %912 = vmatpush1.msra.mxu0 0.0
    %913 = vmatprep.subr.mxu0 0.0
    %914 = vmatpush1.msra.mxu0 0.0
    %915 = vmatprep.subr.mxu0 0.0
    %916 = vmatpush1.msra.mxu0 0.0
    %917 = vmatprep.subr.mxu0 0.0
    %918 = vmatpush1.msra.mxu0 0.0
    %919 = vmatprep.subr.mxu0 0.0
    %920 = vmatpush1.msra.mxu0 0.0
    %921 = vmatprep.subr.mxu0 0.0
    %922 = vmatpush1.msra.mxu0 0.0
    %923 = vmatprep.subr.mxu0 0.0
    %924 = vmatpush1.msra.mxu0 0.0
    %925 = vmatprep.subr.mxu0 0.0
    %926 = vmatpush1.msra.mxu0 0.0
    %927 = vmatprep.subr.mxu0 0.0
    %928 = vmatpush1.msra.mxu0 0.0
    %929 = vmatprep.subr.mxu0 0.0
    %930 = vmatpush1.msra.mxu0 0.0
    %931 = vmatprep.subr.mxu0 0.0
    %932 = vmatpush1.msra.mxu0 0.0
    %933 = vmatprep.subr.mxu0 0.0
    %934 = vmatpush1.msra.mxu0 0.0
    %935 = vmatprep.subr.mxu0 0.0
    %936 = vmatpush1.msra.mxu0 0.0
    %937 = vmatprep.subr.mxu0 0.0
    %938 = vmatpush1.msra.mxu0 0.0
    %939 = vmatprep.subr.mxu0 0.0
    %940 = vmatpush1.msra.mxu0 0.0
    %941 = vmatprep.subr.mxu0 0.0
    %942 = vmatpush1.msra.mxu0 0.0
    %943 = vmatprep.subr.mxu0 0.0
    %944 = vmatpush1.msra.mxu0 0.0
    %945 = vmatprep.subr.mxu0 0.0
    %946 = vmatpush1.msra.mxu0 0.0
    %947 = vmatprep.subr.mxu0 0.0
    %948 = vmatpush1.msra.mxu0 0.0
    %949 = vmatprep.subr.mxu0 0.0
    %950 = vmatpush1.msra.mxu0 0.0
    %951 = vmatprep.subr.mxu0 0.0
    %952 = vmatpush1.msra.mxu0 0.0
    %953 = vmatprep.subr.mxu0 0.0
    %954 = vmatpush1.msra.mxu0 0.0
    %955 = vmatprep.subr.mxu0 0.0
    %956 = vmatpush1.msra.mxu0 0.0
    %957 = vmatprep.subr.mxu0 0.0
    %958 = vmatpush1.msra.mxu0 0.0
    %959 = vmatprep.mubr.f32.mxu0 0.0
    %960 = vmatmul.mubr.f32.gmra.mrb[0].mxu0 %v893
    %v961 = vpop.f32.mrb[0].mxu0
    %v962 = vadd.f32 0.0, %v961
    %v963 = vpop.f32.mrb[0].mxu0
    %964 = vdwg.mxu0
    %v966 = vrot.slane %v962, 4
    %v968 = vadd.f32 %v253, %v966
    %v969 = vxor.u32 %v968, 2147483648
    %v970 = vmul.f32 %v969, 1.442695
    %v971 = vpow.pop %v970
    %v972 = vadd.f32 %v971, 1.0
    %v973 = vrcp.pop %v972
    %v974 = vmul.f32 1.0, %v973
    %v975 = vtanh.pop %v968
    %v977 = vrot.slane %v882, 6
    %v979 = vmul.f32 %v974, %v977
    %981 = vrot.lane.b32.xlu0 %v975, 108
    %v982 = vpop.permute.xlu0 %981
    %v984 = vmul.f32 %v974, %v982
    %986 = vrot.lane.b32.xlu0 %v984, 10
    %v987 = vpop.permute.xlu0 %986
    %v989 = vadd.f32 %v979, %v987
    %v990 = vtanh.pop %v989
    %992 = vrot.lane.b32.xlu0 %v990, 20
    %v993 = vpop.permute.xlu0 %992
    %v995 = vmul.f32 %v974, %v993
    %v997 = vrot.slane %v995, 4
    %998 = vrot.lane.b32.xlu0 %v997, 98
    %v999 = vpop.permute.xlu0 %998
    %v1000 = vsel %vm256, %v999, 0
    %1002 = vmatprep.subr.mxu0 0.0
    %1003 = vmatpush1.msra.mxu0 %v254
    %1004 = vmatprep.subr.mxu0 0.0
    %1005 = vmatpush1.msra.mxu0 %v262
    %1006 = vmatprep.subr.mxu0 0.0
    %1007 = vmatpush1.msra.mxu0 0.0
    %1008 = vmatprep.subr.mxu0 0.0
    %1009 = vmatpush1.msra.mxu0 0.0
    %1010 = vmatprep.subr.mxu0 0.0
    %1011 = vmatpush1.msra.mxu0 0.0
    %1012 = vmatprep.subr.mxu0 0.0
    %1013 = vmatpush1.msra.mxu0 0.0
    %1014 = vmatprep.subr.mxu0 0.0
    %1015 = vmatpush1.msra.mxu0 0.0
    %1016 = vmatprep.subr.mxu0 0.0
    %1017 = vmatpush1.msra.mxu0 0.0
    %1018 = vmatprep.subr.mxu0 0.0
    %1019 = vmatpush1.msra.mxu0 0.0
    %1020 = vmatprep.subr.mxu0 0.0
    %1021 = vmatpush1.msra.mxu0 0.0
    %1022 = vmatprep.subr.mxu0 0.0
    %1023 = vmatpush1.msra.mxu0 0.0
    %1024 = vmatprep.subr.mxu0 0.0
    %1025 = vmatpush1.msra.mxu0 0.0
    %1026 = vmatprep.subr.mxu0 0.0
    %1027 = vmatpush1.msra.mxu0 0.0
    %1028 = vmatprep.subr.mxu0 0.0
    %1029 = vmatpush1.msra.mxu0 0.0
    %1030 = vmatprep.subr.mxu0 0.0
    %1031 = vmatpush1.msra.mxu0 0.0
    %1032 = vmatprep.subr.mxu0 0.0
    %1033 = vmatpush1.msra.mxu0 0.0
    %1034 = vmatprep.subr.mxu0 0.0
    %1035 = vmatpush1.msra.mxu0 0.0
    %1036 = vmatprep.subr.mxu0 0.0
    %1037 = vmatpush1.msra.mxu0 0.0
    %1038 = vmatprep.subr.mxu0 0.0
    %1039 = vmatpush1.msra.mxu0 0.0
    %1040 = vmatprep.subr.mxu0 0.0
    %1041 = vmatpush1.msra.mxu0 0.0
    %1042 = vmatprep.subr.mxu0 0.0
    %1043 = vmatpush1.msra.mxu0 0.0
    %1044 = vmatprep.subr.mxu0 0.0
    %1045 = vmatpush1.msra.mxu0 0.0
    %1046 = vmatprep.subr.mxu0 0.0
    %1047 = vmatpush1.msra.mxu0 0.0
    %1048 = vmatprep.subr.mxu0 0.0
    %1049 = vmatpush1.msra.mxu0 0.0
    %1050 = vmatprep.subr.mxu0 0.0
    %1051 = vmatpush1.msra.mxu0 0.0
    %1052 = vmatprep.subr.mxu0 0.0
    %1053 = vmatpush1.msra.mxu0 0.0
    %1054 = vmatprep.subr.mxu0 0.0
    %1055 = vmatpush1.msra.mxu0 0.0
    %1056 = vmatprep.subr.mxu0 0.0
    %1057 = vmatpush1.msra.mxu0 0.0
    %1058 = vmatprep.subr.mxu0 0.0
    %1059 = vmatpush1.msra.mxu0 0.0
    %1060 = vmatprep.subr.mxu0 0.0
    %1061 = vmatpush1.msra.mxu0 0.0
    %1062 = vmatprep.subr.mxu0 0.0
    %1063 = vmatpush1.msra.mxu0 0.0
    %1064 = vmatprep.subr.mxu0 0.0
    %1065 = vmatpush1.msra.mxu0 0.0
    %1066 = vmatprep.mubr.f32.mxu0 0.0
    %1067 = vmatmul.mubr.f32.gmra.mrb[0].mxu0 %v1000
    %v1068 = vpop.f32.mrb[0].mxu0
    %v1069 = vadd.f32 0.0, %v1068
    %v1070 = vpop.f32.mrb[0].mxu0
    %1071 = vdwg.mxu0
    %v1073 = vrot.slane %v1069, 2
    %v1075 = vadd.f32 %v253, %v1073
    %v1076 = vxor.u32 %v1075, 2147483648
    %v1077 = vmul.f32 %v1076, 1.442695
    %v1078 = vpow.pop %v1077
    %v1079 = vadd.f32 %v1078, 1.0
    %v1080 = vrcp.pop %v1079
    %v1081 = vmul.f32 1.0, %v1080
    %v1082 = vtanh.pop %v1075
    %v1084 = vrot.slane %v989, 6
    %v1086 = vmul.f32 %v1081, %v1084
    %1088 = vrot.lane.b32.xlu0 %v1082, 108
    %v1089 = vpop.permute.xlu0 %1088
    %v1091 = vmul.f32 %v1081, %v1089
    %1093 = vrot.lane.b32.xlu0 %v1091, 10
    %v1094 = vpop.permute.xlu0 %1093
    %v1096 = vadd.f32 %v1086, %v1094
    %v1097 = vtanh.pop %v1096
    %1099 = vrot.lane.b32.xlu0 %v1097, 20
    %v1100 = vpop.permute.xlu0 %1099
    %v1102 = vmul.f32 %v1081, %v1100
    %1104 = vrot.lane.b32.xlu0 %v466, 108
    %v1105 = vpop.permute.xlu0 %1104
    %1107 = vrot.lane.b32.xlu0 %v573, 118
    %v1108 = vpop.permute.xlu0 %1107
    %1111 = vrot.lane.b32.xlu0 %v782, 10
    %v1112 = vpop.permute.xlu0 %1111
    %1114 = vrot.lane.b32.xlu0 %v890, 20
    %v1115 = vpop.permute.xlu0 %1114
    %1117 = vrot.lane.b32.xlu0 %v997, 30
    %v1118 = vpop.permute.xlu0 %1117
    %v1121 = vrot.slane %v1102, 6
    %1122 = vrot.lane.b32.xlu0 %v1121, 40
    %v1123 = vpop.permute.xlu0 %1122
    %v1125 = vsel %vm256, %v361, %v1105
    %vm1126 = vcmask 162816
    %v1127 = vsel %vm1126, %v1125, %v1108
    %vm1128 = vcmask 244736
    %v1129 = vsel %vm1128, %v1127, %v680
    %vm1130 = vcmask 326656
    %v1131 = vsel %vm1130, %v1129, %v1112
    %vm1132 = vcmask 408576
    %v1133 = vsel %vm1132, %v1131, %v1115
    %vm1134 = vcmask 490496
    %v1135 = vsel %vm1134, %v1133, %v1118
    %vm1136 = vcmask 572416
    %v1137 = vsel %vm1136, %v1135, %v1123
    %v1139 = vrot.slane %v1102, 4
    %1140 = vrot.lane.b32.xlu0 %v1139, 123
    %v1141 = vpop.permute.xlu0 %1140
    %v1143 = vsel %vm260, %v1121, %v1141
    %v1144 = vld [vmem:[%s6] sm:$0x3]
    %1146 = vrot.lane.b32.xlu0 %v1143, 98
    %v1147 = vpop.permute.xlu0 %1146
    %vm1148 = vcmask 31744
    %v1150 = vsel %vm1148, %v1144, 0
    %vm1152 = vcmask 1043456
    %v1153 = vsel %vm1152, %v1147, 0
    %1155 = vmatprep.subr.mxu0 0.0
    %1156 = vmatpush1.msra.mxu0 %v1153
    %1157 = vmatprep.subr.mxu0 0.0
    %1158 = vmatpush1.msra.mxu0 0.0
    %1159 = vmatprep.subr.mxu0 0.0
    %1160 = vmatpush1.msra.mxu0 0.0
    %1161 = vmatprep.subr.mxu0 0.0
    %1162 = vmatpush1.msra.mxu0 0.0
    %1163 = vmatprep.subr.mxu0 0.0
    %1164 = vmatpush1.msra.mxu0 0.0
    %1165 = vmatprep.subr.mxu0 0.0
    %1166 = vmatpush1.msra.mxu0 0.0
    %1167 = vmatprep.subr.mxu0 0.0
    %1168 = vmatpush1.msra.mxu0 0.0
    %1169 = vmatprep.subr.mxu0 0.0
    %1170 = vmatpush1.msra.mxu0 0.0
    %1171 = vmatprep.subr.mxu0 0.0
    %1172 = vmatpush1.msra.mxu0 0.0
    %1173 = vmatprep.subr.mxu0 0.0
    %1174 = vmatpush1.msra.mxu0 0.0
    %1175 = vmatprep.subr.mxu0 0.0
    %1176 = vmatpush1.msra.mxu0 0.0
    %1177 = vmatprep.subr.mxu0 0.0
    %1178 = vmatpush1.msra.mxu0 0.0
    %1179 = vmatprep.subr.mxu0 0.0
    %1180 = vmatpush1.msra.mxu0 0.0
    %1181 = vmatprep.subr.mxu0 0.0
    %1182 = vmatpush1.msra.mxu0 0.0
    %1183 = vmatprep.subr.mxu0 0.0
    %1184 = vmatpush1.msra.mxu0 0.0
    %1185 = vmatprep.subr.mxu0 0.0
    %1186 = vmatpush1.msra.mxu0 0.0
    %1187 = vmatprep.subr.mxu0 0.0
    %1188 = vmatpush1.msra.mxu0 0.0
    %1189 = vmatprep.subr.mxu0 0.0
    %1190 = vmatpush1.msra.mxu0 0.0
    %1191 = vmatprep.subr.mxu0 0.0
    %1192 = vmatpush1.msra.mxu0 0.0
    %1193 = vmatprep.subr.mxu0 0.0
    %1194 = vmatpush1.msra.mxu0 0.0
    %1195 = vmatprep.subr.mxu0 0.0
    %1196 = vmatpush1.msra.mxu0 0.0
    %1197 = vmatprep.subr.mxu0 0.0
    %1198 = vmatpush1.msra.mxu0 0.0
    %1199 = vmatprep.subr.mxu0 0.0
    %1200 = vmatpush1.msra.mxu0 0.0
    %1201 = vmatprep.subr.mxu0 0.0
    %1202 = vmatpush1.msra.mxu0 0.0
    %1203 = vmatprep.subr.mxu0 0.0
    %1204 = vmatpush1.msra.mxu0 0.0
    %1205 = vmatprep.subr.mxu0 0.0
    %1206 = vmatpush1.msra.mxu0 0.0
    %1207 = vmatprep.subr.mxu0 0.0
    %1208 = vmatpush1.msra.mxu0 0.0
    %1209 = vmatprep.subr.mxu0 0.0
    %1210 = vmatpush1.msra.mxu0 0.0
    %1211 = vmatprep.subr.mxu0 0.0
    %1212 = vmatpush1.msra.mxu0 0.0
    %1213 = vmatprep.subr.mxu0 0.0
    %1214 = vmatpush1.msra.mxu0 0.0
    %1215 = vmatprep.subr.mxu0 0.0
    %1216 = vmatpush1.msra.mxu0 0.0
    %1217 = vmatprep.subr.mxu0 0.0
    %1218 = vmatpush1.msra.mxu0 0.0
    %1219 = vmatprep.mubr.f32.mxu0 0.0
    %1220 = vmatmul.mubr.f32.gmra.mrb[0].mxu0 %v1150
    %v1221 = vpop.f32.mrb[0].mxu0
    %v1222 = vadd.f32 0.0, %v1221
    %v1223 = vpop.f32.mrb[0].mxu0
    %1224 = vdwg.mxu0
    %v1225 = vld [vmem:[%s7] sm:$0x3]
    %v1227 = vsel %vm1148, %v1225, 0
    %1229 = vmatprep.subr.mxu0 0.0
    %1230 = vmatpush1.msra.mxu0 %v1153
    %1231 = vmatprep.subr.mxu0 0.0
    %1232 = vmatpush1.msra.mxu0 0.0
    %1233 = vmatprep.subr.mxu0 0.0
    %1234 = vmatpush1.msra.mxu0 0.0
    %1235 = vmatprep.subr.mxu0 0.0
    %1236 = vmatpush1.msra.mxu0 0.0
    %1237 = vmatprep.subr.mxu0 0.0
    %1238 = vmatpush1.msra.mxu0 0.0
    %1239 = vmatprep.subr.mxu0 0.0
    %1240 = vmatpush1.msra.mxu0 0.0
    %1241 = vmatprep.subr.mxu0 0.0
    %1242 = vmatpush1.msra.mxu0 0.0
    %1243 = vmatprep.subr.mxu0 0.0
    %1244 = vmatpush1.msra.mxu0 0.0
    %1245 = vmatprep.subr.mxu0 0.0
    %1246 = vmatpush1.msra.mxu0 0.0
    %1247 = vmatprep.subr.mxu0 0.0
    %1248 = vmatpush1.msra.mxu0 0.0
    %1249 = vmatprep.subr.mxu0 0.0
    %1250 = vmatpush1.msra.mxu0 0.0
    %1251 = vmatprep.subr.mxu0 0.0
    %1252 = vmatpush1.msra.mxu0 0.0
    %1253 = vmatprep.subr.mxu0 0.0
    %1254 = vmatpush1.msra.mxu0 0.0
    %1255 = vmatprep.subr.mxu0 0.0
    %1256 = vmatpush1.msra.mxu0 0.0
    %1257 = vmatprep.subr.mxu0 0.0
    %1258 = vmatpush1.msra.mxu0 0.0
    %1259 = vmatprep.subr.mxu0 0.0
    %1260 = vmatpush1.msra.mxu0 0.0
    %1261 = vmatprep.subr.mxu0 0.0
    %1262 = vmatpush1.msra.mxu0 0.0
    %1263 = vmatprep.subr.mxu0 0.0
    %1264 = vmatpush1.msra.mxu0 0.0
    %1265 = vmatprep.subr.mxu0 0.0
    %1266 = vmatpush1.msra.mxu0 0.0
    %1267 = vmatprep.subr.mxu0 0.0
    %1268 = vmatpush1.msra.mxu0 0.0
    %1269 = vmatprep.subr.mxu0 0.0
    %1270 = vmatpush1.msra.mxu0 0.0
    %1271 = vmatprep.subr.mxu0 0.0
    %1272 = vmatpush1.msra.mxu0 0.0
    %1273 = vmatprep.subr.mxu0 0.0
    %1274 = vmatpush1.msra.mxu0 0.0
    %1275 = vmatprep.subr.mxu0 0.0
    %1276 = vmatpush1.msra.mxu0 0.0
    %1277 = vmatprep.subr.mxu0 0.0
    %1278 = vmatpush1.msra.mxu0 0.0
    %1279 = vmatprep.subr.mxu0 0.0
    %1280 = vmatpush1.msra.mxu0 0.0
    %1281 = vmatprep.subr.mxu0 0.0
    %1282 = vmatpush1.msra.mxu0 0.0
    %1283 = vmatprep.subr.mxu0 0.0
    %1284 = vmatpush1.msra.mxu0 0.0
    %1285 = vmatprep.subr.mxu0 0.0
    %1286 = vmatpush1.msra.mxu0 0.0
    %1287 = vmatprep.subr.mxu0 0.0
    %1288 = vmatpush1.msra.mxu0 0.0
    %1289 = vmatprep.subr.mxu0 0.0
    %1290 = vmatpush1.msra.mxu0 0.0
    %1291 = vmatprep.subr.mxu0 0.0
    %1292 = vmatpush1.msra.mxu0 0.0
    %1293 = vmatprep.mubr.f32.mxu0 0.0
    %1294 = vmatmul.mubr.f32.gmra.mrb[0].mxu0 %v1227
    %v1295 = vpop.f32.mrb[0].mxu0
    %v1296 = vadd.f32 0.0, %v1295
    %v1297 = vpop.f32.mrb[0].mxu0
    %1298 = vdwg.mxu0
    %1300 = vrot.lane.b32.xlu0 %v1296, 5
    %v1301 = vpop.permute.xlu0 %1300
    %vm1303 = vcmask 39936
    %v1304 = vsel %vm1303, %v1222, %v1301
    %v1305 = vld [vmem:[%s8] sm:$0xff]
    %v1306 = vld [vmem:[%s8 + $0x8] sm:$0x3]
    %v1308 = vsel %vm256, %v1304, 0
    %v1311 = vsel %vm260, %v1306, 0
    %1313 = vmatprep.subr.mxu0 0.0
    %1314 = vmatpush1.msra.mxu0 %v1305
    %1315 = vmatprep.subr.mxu0 0.0
    %1316 = vmatpush1.msra.mxu0 %v1311
    %1317 = vmatprep.subr.mxu0 0.0
    %1318 = vmatpush1.msra.mxu0 0.0
    %1319 = vmatprep.subr.mxu0 0.0
    %1320 = vmatpush1.msra.mxu0 0.0
    %1321 = vmatprep.subr.mxu0 0.0
    %1322 = vmatpush1.msra.mxu0 0.0
    %1323 = vmatprep.subr.mxu0 0.0
    %1324 = vmatpush1.msra.mxu0 0.0
    %1325 = vmatprep.subr.mxu0 0.0
    %1326 = vmatpush1.msra.mxu0 0.0
    %1327 = vmatprep.subr.mxu0 0.0
    %1328 = vmatpush1.msra.mxu0 0.0
    %1329 = vmatprep.subr.mxu0 0.0
    %1330 = vmatpush1.msra.mxu0 0.0
    %1331 = vmatprep.subr.mxu0 0.0
    %1332 = vmatpush1.msra.mxu0 0.0
    %1333 = vmatprep.subr.mxu0 0.0
    %1334 = vmatpush1.msra.mxu0 0.0
    %1335 = vmatprep.subr.mxu0 0.0
    %1336 = vmatpush1.msra.mxu0 0.0
    %1337 = vmatprep.subr.mxu0 0.0
    %1338 = vmatpush1.msra.mxu0 0.0
    %1339 = vmatprep.subr.mxu0 0.0
    %1340 = vmatpush1.msra.mxu0 0.0
    %1341 = vmatprep.subr.mxu0 0.0
    %1342 = vmatpush1.msra.mxu0 0.0
    %1343 = vmatprep.subr.mxu0 0.0
    %1344 = vmatpush1.msra.mxu0 0.0
    %1345 = vmatprep.subr.mxu0 0.0
    %1346 = vmatpush1.msra.mxu0 0.0
    %1347 = vmatprep.subr.mxu0 0.0
    %1348 = vmatpush1.msra.mxu0 0.0
    %1349 = vmatprep.subr.mxu0 0.0
    %1350 = vmatpush1.msra.mxu0 0.0
    %1351 = vmatprep.subr.mxu0 0.0
    %1352 = vmatpush1.msra.mxu0 0.0
    %1353 = vmatprep.subr.mxu0 0.0
    %1354 = vmatpush1.msra.mxu0 0.0
    %1355 = vmatprep.subr.mxu0 0.0
    %1356 = vmatpush1.msra.mxu0 0.0
    %1357 = vmatprep.subr.mxu0 0.0
    %1358 = vmatpush1.msra.mxu0 0.0
    %1359 = vmatprep.subr.mxu0 0.0
    %1360 = vmatpush1.msra.mxu0 0.0
    %1361 = vmatprep.subr.mxu0 0.0
    %1362 = vmatpush1.msra.mxu0 0.0
    %1363 = vmatprep.subr.mxu0 0.0
    %1364 = vmatpush1.msra.mxu0 0.0
    %1365 = vmatprep.subr.mxu0 0.0
    %1366 = vmatpush1.msra.mxu0 0.0
    %1367 = vmatprep.subr.mxu0 0.0
    %1368 = vmatpush1.msra.mxu0 0.0
    %1369 = vmatprep.subr.mxu0 0.0
    %1370 = vmatpush1.msra.mxu0 0.0
    %1371 = vmatprep.subr.mxu0 0.0
    %1372 = vmatpush1.msra.mxu0 0.0
    %1373 = vmatprep.subr.mxu0 0.0
    %1374 = vmatpush1.msra.mxu0 0.0
    %1375 = vmatprep.subr.mxu0 0.0
    %1376 = vmatpush1.msra.mxu0 0.0
    %1377 = vmatprep.mubr.f32.mxu0 0.0
    %1378 = vmatmul.mubr.f32.gmra.mrb[0].mxu0 %v1308
    %v1379 = vpop.f32.mrb[0].mxu0
    %v1380 = vadd.f32 0.0, %v1379
    %v1381 = vpop.f32.mrb[0].mxu0
    %1382 = vdwg.mxu0
    %v1383 = vmul.f32 %v1137, %v1380
    %v1384 = vld [vmem:[%s9] sm:$0xff]
    %v1385 = vld [vmem:[%s9 + $0x8] sm:$0xff]
    %v1386 = vld [vmem:[%s9 + $0x10] sm:$0xff]
    %v1387 = vld [vmem:[%s9 + $0x18] sm:$0xff]
    %v1388 = vld [vmem:[%s9 + $0x20] sm:$0xff]
    %v1389 = vld [vmem:[%s9 + $0x28] sm:$0xff]
    %v1390 = vld [vmem:[%s9 + $0x30] sm:$0xff]
    %v1391 = vld [vmem:[%s9 + $0x38] sm:$0xff]
    %v1392 = vld [vmem:[%s9 + $0x40] sm:$0xff]
    %v1393 = vld [vmem:[%s9 + $0x48] sm:$0xff]
    %vm1394 = vcmask 654336
    %v1396 = vsel %vm1394, %v1383, 0
    %1398 = vmatprep.subr.mxu0 0.0
    %1399 = vmatpush1.msra.mxu0 %v1384
    %1400 = vmatprep.subr.mxu0 0.0
    %1401 = vmatpush1.msra.mxu0 %v1385
    %1402 = vmatprep.subr.mxu0 0.0
    %1403 = vmatpush1.msra.mxu0 %v1386
    %1404 = vmatprep.subr.mxu0 0.0
    %1405 = vmatpush1.msra.mxu0 %v1387
    %1406 = vmatprep.subr.mxu0 0.0
    %1407 = vmatpush1.msra.mxu0 %v1388
    %1408 = vmatprep.subr.mxu0 0.0
    %1409 = vmatpush1.msra.mxu0 %v1389
    %1410 = vmatprep.subr.mxu0 0.0
    %1411 = vmatpush1.msra.mxu0 %v1390
    %1412 = vmatprep.subr.mxu0 0.0
    %1413 = vmatpush1.msra.mxu0 %v1391
    %1414 = vmatprep.subr.mxu0 0.0
    %1415 = vmatpush1.msra.mxu0 %v1392
    %1416 = vmatprep.subr.mxu0 0.0
    %1417 = vmatpush1.msra.mxu0 %v1393
    %1418 = vmatprep.subr.mxu0 0.0
    %1419 = vmatpush1.msra.mxu0 0.0
    %1420 = vmatprep.subr.mxu0 0.0
    %1421 = vmatpush1.msra.mxu0 0.0
    %1422 = vmatprep.subr.mxu0 0.0
    %1423 = vmatpush1.msra.mxu0 0.0
    %1424 = vmatprep.subr.mxu0 0.0
    %1425 = vmatpush1.msra.mxu0 0.0
    %1426 = vmatprep.subr.mxu0 0.0
    %1427 = vmatpush1.msra.mxu0 0.0
    %1428 = vmatprep.subr.mxu0 0.0
    %1429 = vmatpush1.msra.mxu0 0.0
    %1430 = vmatprep.subr.mxu0 0.0
    %1431 = vmatpush1.msra.mxu0 0.0
    %1432 = vmatprep.subr.mxu0 0.0
    %1433 = vmatpush1.msra.mxu0 0.0
    %1434 = vmatprep.subr.mxu0 0.0
    %1435 = vmatpush1.msra.mxu0 0.0
    %1436 = vmatprep.subr.mxu0 0.0
    %1437 = vmatpush1.msra.mxu0 0.0
    %1438 = vmatprep.subr.mxu0 0.0
    %1439 = vmatpush1.msra.mxu0 0.0
    %1440 = vmatprep.subr.mxu0 0.0
    %1441 = vmatpush1.msra.mxu0 0.0
    %1442 = vmatprep.subr.mxu0 0.0
    %1443 = vmatpush1.msra.mxu0 0.0
    %1444 = vmatprep.subr.mxu0 0.0
    %1445 = vmatpush1.msra.mxu0 0.0
    %1446 = vmatprep.subr.mxu0 0.0
    %1447 = vmatpush1.msra.mxu0 0.0
    %1448 = vmatprep.subr.mxu0 0.0
    %1449 = vmatpush1.msra.mxu0 0.0
    %1450 = vmatprep.subr.mxu0 0.0
    %1451 = vmatpush1.msra.mxu0 0.0
    %1452 = vmatprep.subr.mxu0 0.0
    %1453 = vmatpush1.msra.mxu0 0.0
    %1454 = vmatprep.subr.mxu0 0.0
    %1455 = vmatpush1.msra.mxu0 0.0
    %1456 = vmatprep.subr.mxu0 0.0
    %1457 = vmatpush1.msra.mxu0 0.0
    %1458 = vmatprep.subr.mxu0 0.0
    %1459 = vmatpush1.msra.mxu0 0.0
    %1460 = vmatprep.subr.mxu0 0.0
    %1461 = vmatpush1.msra.mxu0 0.0
    %1462 = vmatprep.mubr.f32.mxu0 0.0
    %1463 = vmatmul.mubr.f32.gmra.mrb[0].mxu0 %v1396
    %v1464 = vpop.f32.mrb[0].mxu0
    %v1465 = vadd.f32 0.0, %v1464
    %v1466 = vpop.f32.mrb[0].mxu0
    %1467 = vdwg.mxu0
    %vm1468 = vcmask 58368
    %v1469 = vsel %vm1468, %v1465, -inf
    %1470 = vmax.xlane.f32.xlu0 %v1469
    %v1471 = vpop.xlane.xlu0 %1470
    %v1472 = vsub.f32 %v1465, %v1471
    %v1473 = vmul.f32 %v1472, 1.442695
    %v1474 = vpow.pop %v1473
    %v1475 = vsel %vm1468, %v1474, 0.0
    %1476 = vadd.xlane.f32.xlu0 %v1475
    %v1477 = vpop.xlane.xlu0 %1476
    %v1478 = vrcp.pop %v1477
    %v1479 = vmul.f32 %v1477, %v1478
    %v1480 = vsub.f32 2.0, %v1479
    %v1481 = vmul.f32 %v1478, %v1480
    %v1482 = vmul.f32 %v1474, %v1481
    %1483 = vst.msk [vmem:[#allocation4] sm:$0x3] %vm1468, %v1482
    %v1484 = vld [vmem:[%s10] sm:$0xff]
    %vm1485 = vcmask 64512
    %v1487 = vsel %vm1485, %v1482, 0
    %1489 = vmatprep.subr.mxu0 0.0
    %1490 = vmatpush1.msra.mxu0 %v1484
    %1491 = vmatprep.subr.mxu0 0.0
    %1492 = vmatpush1.msra.mxu0 0.0
    %1493 = vmatprep.subr.mxu0 0.0
    %1494 = vmatpush1.msra.mxu0 0.0
    %1495 = vmatprep.subr.mxu0 0.0
    %1496 = vmatpush1.msra.mxu0 0.0
    %1497 = vmatprep.subr.mxu0 0.0
    %1498 = vmatpush1.msra.mxu0 0.0
    %1499 = vmatprep.subr.mxu0 0.0
    %1500 = vmatpush1.msra.mxu0 0.0
    %1501 = vmatprep.subr.mxu0 0.0
    %1502 = vmatpush1.msra.mxu0 0.0
    %1503 = vmatprep.subr.mxu0 0.0
    %1504 = vmatpush1.msra.mxu0 0.0
    %1505 = vmatprep.subr.mxu0 0.0
    %1506 = vmatpush1.msra.mxu0 0.0
    %1507 = vmatprep.subr.mxu0 0.0
    %1508 = vmatpush1.msra.mxu0 0.0
    %1509 = vmatprep.subr.mxu0 0.0
    %1510 = vmatpush1.msra.mxu0 0.0
    %1511 = vmatprep.subr.mxu0 0.0
    %1512 = vmatpush1.msra.mxu0 0.0
    %1513 = vmatprep.subr.mxu0 0.0
    %1514 = vmatpush1.msra.mxu0 0.0
    %1515 = vmatprep.subr.mxu0 0.0
    %1516 = vmatpush1.msra.mxu0 0.0
    %1517 = vmatprep.subr.mxu0 0.0
    %1518 = vmatpush1.msra.mxu0 0.0
    %1519 = vmatprep.subr.mxu0 0.0
    %1520 = vmatpush1.msra.mxu0 0.0
    %1521 = vmatprep.subr.mxu0 0.0
    %1522 = vmatpush1.msra.mxu0 0.0
    %1523 = vmatprep.subr.mxu0 0.0
    %1524 = vmatpush1.msra.mxu0 0.0
    %1525 = vmatprep.subr.mxu0 0.0
    %1526 = vmatpush1.msra.mxu0 0.0
    %1527 = vmatprep.subr.mxu0 0.0
    %1528 = vmatpush1.msra.mxu0 0.0
    %1529 = vmatprep.subr.mxu0 0.0
    %1530 = vmatpush1.msra.mxu0 0.0
    %1531 = vmatprep.subr.mxu0 0.0
    %1532 = vmatpush1.msra.mxu0 0.0
    %1533 = vmatprep.subr.mxu0 0.0
    %1534 = vmatpush1.msra.mxu0 0.0
    %1535 = vmatprep.subr.mxu0 0.0
    %1536 = vmatpush1.msra.mxu0 0.0
    %1537 = vmatprep.subr.mxu0 0.0
    %1538 = vmatpush1.msra.mxu0 0.0
    %1539 = vmatprep.subr.mxu0 0.0
    %1540 = vmatpush1.msra.mxu0 0.0
    %1541 = vmatprep.subr.mxu0 0.0
    %1542 = vmatpush1.msra.mxu0 0.0
    %1543 = vmatprep.subr.mxu0 0.0
    %1544 = vmatpush1.msra.mxu0 0.0
    %1545 = vmatprep.subr.mxu0 0.0
    %1546 = vmatpush1.msra.mxu0 0.0
    %1547 = vmatprep.subr.mxu0 0.0
    %1548 = vmatpush1.msra.mxu0 0.0
    %1549 = vmatprep.subr.mxu0 0.0
    %1550 = vmatpush1.msra.mxu0 0.0
    %1551 = vmatprep.subr.mxu0 0.0
    %1552 = vmatpush1.msra.mxu0 0.0
    %1553 = vmatprep.mubr.f32.mxu0 0.0
    %1554 = vmatmul.mubr.f32.gmra.mrb[0].mxu0 %v1487
    %v1555 = vpop.f32.mrb[0].mxu0
    %v1556 = vadd.f32 0.0, %v1555
    %v1557 = vpop.f32.mrb[0].mxu0
    %1558 = vdwg.mxu0
    %v1559 = vmul.f32 %v1137, %v1556
    %v1560 = vld [vmem:[%s11] sm:$0xff]
    %v1561 = vld [vmem:[%s11 + $0x8] sm:$0xff]
    %v1562 = vld [vmem:[%s11 + $0x10] sm:$0xff]
    %v1563 = vld [vmem:[%s11 + $0x18] sm:$0xff]
    %v1564 = vld [vmem:[%s11 + $0x20] sm:$0xff]
    %v1565 = vld [vmem:[%s11 + $0x28] sm:$0xff]
    %v1566 = vld [vmem:[%s11 + $0x30] sm:$0xff]
    %v1567 = vld [vmem:[%s11 + $0x38] sm:$0xff]
    %v1568 = vld [vmem:[%s11 + $0x40] sm:$0xff]
    %v1569 = vld [vmem:[%s11 + $0x48] sm:$0xff]
    %v1570 = vld [vmem:[%s12] sm:$0x1]
    %v1572 = vlaneseq
    %v1573 = vshrl.u32 %v1572, 7
    %v1574 = vsub.s32 0, %v1573
    %v1575 = vrot.slane %v1570, %v1574
    %v1578 = vsel %vm1394, %v1559, 0
    %1580 = vmatprep.subr.mxu0 0.0
    %1581 = vmatpush1.msra.mxu0 %v1560
    %1582 = vmatprep.subr.mxu0 0.0
    %1583 = vmatpush1.msra.mxu0 %v1561
    %1584 = vmatprep.subr.mxu0 0.0
    %1585 = vmatpush1.msra.mxu0 %v1562
    %1586 = vmatprep.subr.mxu0 0.0
    %1587 = vmatpush1.msra.mxu0 %v1563
    %1588 = vmatprep.subr.mxu0 0.0
    %1589 = vmatpush1.msra.mxu0 %v1564
    %1590 = vmatprep.subr.mxu0 0.0
    %1591 = vmatpush1.msra.mxu0 %v1565
    %1592 = vmatprep.subr.mxu0 0.0
    %1593 = vmatpush1.msra.mxu0 %v1566
    %1594 = vmatprep.subr.mxu0 0.0
    %1595 = vmatpush1.msra.mxu0 %v1567
    %1596 = vmatprep.subr.mxu0 0.0
    %1597 = vmatpush1.msra.mxu0 %v1568
    %1598 = vmatprep.subr.mxu0 0.0
    %1599 = vmatpush1.msra.mxu0 %v1569
    %1600 = vmatprep.subr.mxu0 0.0
    %1601 = vmatpush1.msra.mxu0 0.0
    %1602 = vmatprep.subr.mxu0 0.0
    %1603 = vmatpush1.msra.mxu0 0.0
    %1604 = vmatprep.subr.mxu0 0.0
    %1605 = vmatpush1.msra.mxu0 0.0
    %1606 = vmatprep.subr.mxu0 0.0
    %1607 = vmatpush1.msra.mxu0 0.0
    %1608 = vmatprep.subr.mxu0 0.0
    %1609 = vmatpush1.msra.mxu0 0.0
    %1610 = vmatprep.subr.mxu0 0.0
    %1611 = vmatpush1.msra.mxu0 0.0
    %1612 = vmatprep.subr.mxu0 0.0
    %1613 = vmatpush1.msra.mxu0 0.0
    %1614 = vmatprep.subr.mxu0 0.0
    %1615 = vmatpush1.msra.mxu0 0.0
    %1616 = vmatprep.subr.mxu0 0.0
    %1617 = vmatpush1.msra.mxu0 0.0
    %1618 = vmatprep.subr.mxu0 0.0
    %1619 = vmatpush1.msra.mxu0 0.0
    %1620 = vmatprep.subr.mxu0 0.0
    %1621 = vmatpush1.msra.mxu0 0.0
    %1622 = vmatprep.subr.mxu0 0.0
    %1623 = vmatpush1.msra.mxu0 0.0
    %1624 = vmatprep.subr.mxu0 0.0
    %1625 = vmatpush1.msra.mxu0 0.0
    %1626 = vmatprep.subr.mxu0 0.0
    %1627 = vmatpush1.msra.mxu0 0.0
    %1628 = vmatprep.subr.mxu0 0.0
    %1629 = vmatpush1.msra.mxu0 0.0
    %1630 = vmatprep.subr.mxu0 0.0
    %1631 = vmatpush1.msra.mxu0 0.0
    %1632 = vmatprep.subr.mxu0 0.0
    %1633 = vmatpush1.msra.mxu0 0.0
    %1634 = vmatprep.subr.mxu0 0.0
    %1635 = vmatpush1.msra.mxu0 0.0
    %1636 = vmatprep.subr.mxu0 0.0
    %1637 = vmatpush1.msra.mxu0 0.0
    %1638 = vmatprep.subr.mxu0 0.0
    %1639 = vmatpush1.msra.mxu0 0.0
    %1640 = vmatprep.subr.mxu0 0.0
    %1641 = vmatpush1.msra.mxu0 0.0
    %1642 = vmatprep.subr.mxu0 0.0
    %1643 = vmatpush1.msra.mxu0 0.0
    %1644 = vmatprep.mubr.f32.mxu0 0.0
    %1645 = vmatmul.mubr.f32.gmra.mrb[0].mxu0 %v1578
    %v1646 = vpop.f32.mrb[0].mxu0
    %v1647 = vadd.f32 %v1575, %v1646
    %v1648 = vpop.f32.mrb[0].mxu0
    %1649 = vdwg.mxu0
    %vm1650 = vcmask 9216
    %1651 = vst.msk [vmem:[#allocation2] sm:$0x3] %vm1650, %v1647
    // Predicated region
    $region54: #{tpu_custom_call.1} parent=1 // pred_check
      _
    $region55: #{tpu_custom_call.1} parent=1 // pred_check_branch
      %1653 = sbr.rel (0) target = $region57
    $region56: #{tpu_custom_call.1} parent=1 // pred_region
      %s1655 = ssub.s32 32, 32
      %1656 = vsyncadd [#allocation3], %s1655
      %s1658 = sshll.u32 [#allocation2], 4
      %s1659 = int_to_ptr.vmem [resolvable:$true] %s1658
      %1661 = dma.vmem_to_hbm [thread:$0]  %s1659, 32, %s13, [#allocation3]
    $region57: #{tpu_custom_call.1} parent=1 // pred_fallthru
      _
    // Predicated region
    $region58: #{tpu_custom_call.1} parent=1 // pred_check
      _
    $region59: #{tpu_custom_call.1} parent=1 // pred_check_branch
      %1663 = sbr.rel (0) target = $region61
    $region60: #{tpu_custom_call.1} parent=1 // pred_region
      %s1665 = ssub.s32 32, 32
      %1666 = vsyncadd [#allocation5], %s1665
      %s1668 = sshll.u32 [#allocation4], 4
      %s1669 = int_to_ptr.vmem [resolvable:$true] %s1668
      %1671 = dma.vmem_to_hbm [thread:$0]  %s1669, 32, %s14, [#allocation5]
    $region61: #{tpu_custom_call.1} parent=1 // pred_fallthru
      _
    // Predicated region
    $region62: #{tpu_custom_call.1} parent=1 // pred_check
      _
    $region63: #{tpu_custom_call.1} parent=1 // pred_check_branch
      %1673 = sbr.rel (0) target = $region65
    $region64: #{tpu_custom_call.1} parent=1 // pred_region
      %1674 = dma.done [#allocation3], 32
    $region65: #{tpu_custom_call.1} parent=1 // pred_fallthru
      _
    // Predicated region
    $region66: #{tpu_custom_call.1} parent=1 // pred_check
      _
    $region67: #{tpu_custom_call.1} parent=1 // pred_check_branch
      %1676 = sbr.rel (0) target = $region69
    $region68: #{tpu_custom_call.1} parent=1 // pred_region
      %1677 = dma.done [#allocation5], 32
    $region69: #{tpu_custom_call.1} parent=1 // pred_fallthru
      _
    %1678 = vsyncpa [#allocation3], 1
    %1679 = vsyncpa [#allocation5], 1

</llo_original>
